<compile_context>
chip_gen: v6e
topology: v6e:2x2x1
jax: 0.10.0
libtpu: 0.0.40
codegen_flags: <defaults>
</compile_context>

<pallas_src>
import functools

import jax
import jax.numpy as jnp
import numpy as np
from jax.experimental import pallas as pl
from jax.experimental.pallas import tpu as pltpu


def _round_up(x, m):
    return ((x + m - 1) // m) * m


def _chip_info():
    """Best-effort (VMEM bytes per TensorCore, TensorCores per chip)."""
    vmem_cap = None
    cores = None
    try:
        info = pltpu.get_tpu_info()
        for name in ("vmem_capacity_bytes", "vmem_bytes", "vmem_size_bytes"):
            v = getattr(info, name, None)
            if isinstance(v, int) and v > 0:
                vmem_cap = v
                break
        for name in ("num_tensorcores", "tensorcores_per_chip", "num_cores"):
            c = getattr(info, name, None)
            if isinstance(c, int) and c > 0:
                cores = c
                break
    except Exception:
        pass
    kind = ""
    try:
        kind = jax.devices()[0].device_kind.lower()
    except Exception:
        pass
    if cores is None:
        cores = 2 if "v7" in kind else 1            # v7x: 2 TCs / chip
    if vmem_cap is None:
        vmem_cap = (64 << 20) if "v7" in kind else (128 << 20)
    return int(vmem_cap), int(cores)


def _pick_bt(B, NC, cap, n_cores):
    """Largest bt <= cap (VMEM-derived) with layout-friendly preferences."""
    cap = max(1, min(int(B), int(cap)))
    if n_cores >= 2 and B >= 2:
        # Dual-TC chips: guarantee >= 2 grid steps so "parallel" can shard.
        cap = min(cap, -(-B // 2))
    lo = max(1, cap // 2)
    best, best_score = cap, -1
    for d in range(cap, lo - 1, -1):
        score = 0
        if B % d == 0:
            score += 2          # no padded batch rows (wrapper pads become no-ops)
        if (d * NC) % 128 == 0:
            score += 1          # lane-dense unmasked output stores
        if score > best_score:  # descending d => ties keep the larger tile
            best, best_score = d, score
    return best


def _coco_kernel(img_ref, sent_ref, imgc_ref, sentc_ref,
                 wimg_ref, bimg_ref, wsent_ref, bsent_ref,
                 out_ref, *, nc):
    """One grid step: bt anchor rows + tn = bt*nc contrastive rows.

    Ref shapes (leading size-1 grid dim indexed away inside):
      img_ref   : (1, bt, Ki)      sent_ref  : (1, bt, Ks)     (compute dtype)
      imgc_ref  : (1, tn, Ki)      sentc_ref : (1, tn, Ks)     (compute dtype)
      wimg_ref  : (Ki, P)          wsent_ref : (Ks, P)         (compute dtype)
      bimg_ref  : (1, P) f32       bsent_ref : (1, P) f32
      out_ref   : (1, 3, tn) f32   rows = [anchor, img_sentc, sent_imgc]
    """
    w_img, w_sent = wimg_ref[...], wsent_ref[...]
    b_img, b_sent = bimg_ref[...], bsent_ref[...]

    def proj_norm(x, w, b):
        # MXU matmul with f32 accumulation; bias added in f32.
        q = jnp.dot(x, w, preferred_element_type=jnp.float32) + b
        ss = jnp.sum(q * q, axis=-1, keepdims=True)
        # rsqrt routes to the EUP slot; +eps guards all-zero padded rows.
        return q * jax.lax.rsqrt(ss + 1e-30)

    ip = proj_norm(img_ref[0], w_img, b_img)          # (bt, P)  anchor img
    sp = proj_norm(sent_ref[0], w_sent, b_sent)       # (bt, P)  anchor sent
    icp = proj_norm(imgc_ref[0], w_img, b_img)        # (tn, P)  contrastive img
    scp = proj_norm(sentc_ref[0], w_sent, b_sent)     # (tn, P)  contrastive sent

    bt, tn = ip.shape[0], icp.shape[0]

    # (bt, tn) score matrices: contract P of both operands on the MXU,
    # no explicit transpose materialized, result already lane-major.
    dn = (((1,), (1,)), ((), ()))
    s_img = jax.lax.dot_general(ip, scp, dn, preferred_element_type=jnp.float32)
    s_sent = jax.lax.dot_general(sp, icp, dn, preferred_element_type=jnp.float32)

    # anchor . anchor computed once per batch row on the un-replicated tiles.
    a_val = jnp.sum(ip * sp, axis=-1, keepdims=True)                    # (bt, 1)

    # Block-diagonal ownership mask: batch row r owns lanes [r*nc, (r+1)*nc).
    r = jax.lax.broadcasted_iota(jnp.int32, (bt, tn), 0)
    c = jax.lax.broadcasted_iota(jnp.int32, (bt, tn), 1)
    own = jnp.logical_and(c >= r * nc, c < (r + 1) * nc).astype(jnp.float32)

    # Masked sublane (axis-0) reductions -> lane-dense (tn,) rows.
    out_ref[0, 0, :] = jnp.sum(own * a_val, axis=0)    # anchor1 (== anchor2)
    out_ref[0, 1, :] = jnp.sum(own * s_img, axis=0)    # img_sentc
    out_ref[0, 2, :] = jnp.sum(own * s_sent, axis=0)   # sent_imgc


def coco_proj_forward(img, sent, imgc, sentc, params, *,
                      compute_dtype=jnp.bfloat16):
    """Returns (anchor1, anchor2, img_sentc, sent_imgc), each of shape (B*NC,)."""
    B, NC, imgdim = imgc.shape
    sentdim = sentc.shape[-1]
    projdim = params["w_img"].shape[1]

    # ---- feature-axis padding (zero padding is exact) ----------------------
    ki = _round_up(imgdim, 128)
    ks = _round_up(sentdim, 128)
    # 256-align P for the 2x256 MXUs on v6e/v7x when projdim needs >1 tile.
    p = _round_up(projdim, 256) if projdim > 128 else _round_up(projdim, 128)

    cd = jnp.dtype(compute_dtype)
    in_bytes = cd.itemsize

    # ---- VMEM-budgeted row tiling ------------------------------------------
    vmem_cap, n_cores = _chip_info()
    vmem_budget = min(vmem_cap * 3 // 4, 96 << 20)        # ~48 MiB on v7x
    vmem_limit = min(vmem_budget + (16 << 20), vmem_cap * 7 // 8)

    weights_bytes = ((ki + ks) * p) * in_bytes + 2 * p * 4     # single-buffered
    # Per-contrastive-row residency: 2x double-buffered input tiles (img+sent
    # side), ~3 f32 (row, P) temporaries, double-buffered f32 output rows.
    per_c_row = 2 * (ki + ks) * in_bytes + 3 * p * 4 + 2 * 3 * 4
    per_a_row = 2 * (ki + ks) * in_bytes + 2 * p * 4
    margin = 4 << 20
    avail = vmem_budget - weights_bytes - margin
    denom = NC * per_c_row + per_a_row
    avail = max(avail, denom)      # weights that don't fit VMEM are out of scope
    bt_cap = max(1, avail // denom)

    bt = _pick_bt(B, NC, bt_cap, n_cores)
    g = pl.cdiv(B, bt)
    b_pad = g * bt
    tile_n = bt * NC
    n_pad = b_pad * NC

    # ---- pad + cast inputs (no-op copies when already aligned) -------------
    img_p = jnp.pad(img.astype(cd), ((0, b_pad - B), (0, ki - imgdim))
                    ).reshape(g, bt, ki)
    sent_p = jnp.pad(sent.astype(cd), ((0, b_pad - B), (0, ks - sentdim))
                     ).reshape(g, bt, ks)
    imgc_p = jnp.pad(imgc.astype(cd), ((0, b_pad - B), (0, 0), (0, ki - imgdim))
                     ).reshape(g, tile_n, ki)
    sentc_p = jnp.pad(sentc.astype(cd), ((0, b_pad - B), (0, 0), (0, ks - sentdim))
                      ).reshape(g, tile_n, ks)

    def pad2(x, rows, cols):
        return jnp.pad(x, ((0, rows - x.shape[0]), (0, cols - x.shape[1])))

    w_img = pad2(params["w_img"], ki, p).astype(cd)
    w_sent = pad2(params["w_sent"], ks, p).astype(cd)
    b_img = pad2(params["b_img"], 1, p).astype(jnp.float32)    # bias stays f32
    b_sent = pad2(params["b_sent"], 1, p).astype(jnp.float32)

    # ---- specs / cost -------------------------------------------------------
    def row_spec(rr, cc):
        return pl.BlockSpec((1, rr, cc), lambda i: (i, 0, 0))

    def weight_specs(single_buffered):
        kw = {"pipeline_mode": pl.Buffered(1)} if single_buffered else {}
        def full(rr, cc):
            return pl.BlockSpec((rr, cc), lambda i: (0, 0), **kw)
        return [full(ki, p), full(1, p), full(ks, p), full(1, p)]

    flops = int(2 * (b_pad + n_pad) * (ki + ks) * p          # projections
                + 4 * bt * tile_n * p * g                    # two score matmuls
                + 8 * (b_pad + n_pad) * p                    # normalize etc.
                + 6 * bt * tile_n * g)                       # masked reductions
    bytes_accessed = int((b_pad + n_pad) * (ki + ks) * in_bytes
                         + (ki + ks) * p * in_bytes + 2 * p * 4
                         + 3 * n_pad * 4)
    cost = pl.CostEstimate(flops=flops,
                           transcendentals=int(2 * (b_pad + n_pad)),
                           bytes_accessed=bytes_accessed)

    def run(single_buffered_weights):
        return pl.pallas_call(
            functools.partial(_coco_kernel, nc=NC),
            out_shape=jax.ShapeDtypeStruct((g, 3, tile_n), jnp.float32),
            grid_spec=pltpu.PrefetchScalarGridSpec(
                num_scalar_prefetch=0,
                grid=(g,),
                in_specs=[row_spec(bt, ki), row_spec(bt, ks),
                          row_spec(tile_n, ki), row_spec(tile_n, ks)]
                         + weight_specs(single_buffered_weights),
                out_specs=pl.BlockSpec((1, 3, tile_n), lambda i: (i, 0, 0)),
            ),
            compiler_params=pltpu.CompilerParams(
                dimension_semantics=("parallel",),
                vmem_limit_bytes=int(vmem_limit)),
            cost_estimate=cost,
        )(img_p, sent_p, imgc_p, sentc_p, w_img, b_img, w_sent, b_sent)

    try:
        out = run(True)            # single-buffered constant weight operands
    except Exception:
        out = run(False)           # fallback: default double-buffered specs

    rows = jnp.transpose(out, (1, 0, 2)).reshape(3, n_pad)[:, :B * NC]
    anchor = rows[0]
    # anchor2 == anchor1 (sum(a*b) == sum(b*a)); do not recompute it.
    return anchor, anchor, rows[1], rows[2]


def init_params(key, imgdim, sentdim, projdim):
    k1, k2, k3, k4 = jax.random.split(key, 4)
    lim_i = 1.0 / float(np.sqrt(imgdim))
    lim_s = 1.0 / float(np.sqrt(sentdim))
    return {
        # Stored transposed (in_dim, out_dim) so the kernel does x @ W.
        "w_img":  jax.random.uniform(k1, (imgdim, projdim), jnp.float32, -lim_i, lim_i),
        "b_img":  jax.random.uniform(k2, (1, projdim),       jnp.float32, -lim_i, lim_i),
        "w_sent": jax.random.uniform(k3, (sentdim, projdim), jnp.float32, -lim_s, lim_s),
        "b_sent": jax.random.uniform(k4, (1, projdim),       jnp.float32, -lim_s, lim_s),
    }


def _reference_forward(img, sent, imgc, sentc, params):
    """float64 numpy reference (exact w.r.t. MXU pass-count ambiguity)."""
    img, sent, imgc, sentc = (np.asarray(a, np.float64)
                              for a in (img, sent, imgc, sentc))
    w_img = np.asarray(params["w_img"], np.float64)
    b_img = np.asarray(params["b_img"], np.float64)
    w_sent = np.asarray(params["w_sent"], np.float64)
    b_sent = np.asarray(params["b_sent"], np.float64)
    B, NC, imgdim = imgc.shape
    sentdim = sentc.shape[-1]
    N = B * NC
    img_e = np.broadcast_to(img[:, None, :], (B, NC, imgdim)).reshape(N, imgdim)
    sent_e = np.broadcast_to(sent[:, None, :], (B, NC, sentdim)).reshape(N, sentdim)
    imgc_f = imgc.reshape(N, imgdim)
    sentc_f = sentc.reshape(N, sentdim)

    def proj_norm(x, w, b):
        q = x @ w + b
        return q / np.sqrt(np.sum(q * q, axis=1, keepdims=True))

    ip = proj_norm(img_e, w_img, b_img)
    icp = proj_norm(imgc_f, w_img, b_img)
    sp = proj_norm(sent_e, w_sent, b_sent)
    scp = proj_norm(sentc_f, w_sent, b_sent)
    return (np.sum(ip * sp, 1), np.sum(sp * ip, 1),
            np.sum(ip * scp, 1), np.sum(sp * icp, 1))


if __name__ == "__main__":
    B, NC = 2, 4                         # N = B*NC = 8 rows
    imgdim, sentdim, projdim = 32, 24, 16

    key = jax.random.PRNGKey(0)
    kp, k_img, k_sent, k_imgc, k_sentc = jax.random.split(key, 5)
    params = init_params(kp, imgdim, sentdim, projdim)

    img = jax.random.normal(k_img, (B, imgdim), jnp.float32)
    sent = jax.random.normal(k_sent, (B, sentdim), jnp.float32)
    imgc = jax.random.normal(k_imgc, (B, NC, imgdim), jnp.float32)
    sentc = jax.random.normal(k_sentc, (B, NC, sentdim), jnp.float32)

    refs = _reference_forward(img, sent, imgc, sentc, params)
    names = ("anchor1", "anchor2", "img_sentc", "sent_imgc")

    def check(outs, atol, rtol, tag):
        for name, o, r in zip(names, outs, refs):
            o = np.asarray(jax.block_until_ready(o))
            assert o.shape == (B * NC,), (tag, name, o.shape)
            assert np.allclose(o, r, atol=atol, rtol=rtol), (tag, name, o, r)

    # f32 compute path (accuracy reference; tolerance covers MXU pass count).
    outs_f32 = coco_proj_forward(img, sent, imgc, sentc, params,
                                 compute_dtype=jnp.float32)
    check(outs_f32, atol=5e-3, rtol=5e-2, tag="f32")

    # bf16 compute path (performance default).
    outs_bf16 = coco_proj_forward(img, sent, imgc, sentc, params,
                                  compute_dtype=jnp.bfloat16)
    check(outs_bf16, atol=3e-2, rtol=1e-1, tag="bf16")

    print("KERNEL_OK")
</pallas_src>

<mosaic_0001>
module attributes {stable_mosaic.version = 11 : i64} {
  func.func @_coco_kernel(%arg0: i32, %arg1: memref<1x2x128xf32, #tpu.memory_space<vmem>>, %arg2: memref<1x2x128xf32, #tpu.memory_space<vmem>>, %arg3: memref<1x8x128xf32, #tpu.memory_space<vmem>>, %arg4: memref<1x8x128xf32, #tpu.memory_space<vmem>>, %arg5: memref<128x128xf32, #tpu.memory_space<vmem>>, %arg6: memref<1x128xf32, #tpu.memory_space<vmem>>, %arg7: memref<128x128xf32, #tpu.memory_space<vmem>>, %arg8: memref<1x128xf32, #tpu.memory_space<vmem>>, %arg9: memref<1x3x8xf32, #tpu.memory_space<vmem>>) attributes {dimension_semantics = [#tpu.dimension_semantics<parallel>], iteration_bounds = array<i64: 1>, scalar_prefetch = 0 : i64, scratch_operands = 0 : i64, tpu.core_type = #tpu.core_type<tc>, window_params = [{transform_indices = @transform_0, window_bounds = array<i64: 1, 2, 128>}, {transform_indices = @transform_1, window_bounds = array<i64: 1, 2, 128>}, {transform_indices = @transform_2, window_bounds = array<i64: 1, 8, 128>}, {transform_indices = @transform_3, window_bounds = array<i64: 1, 8, 128>}, {pipeline_mode = #tpu.pipeline_mode<synchronous>, transform_indices = @transform_4, window_bounds = array<i64: 128, 128>}, {pipeline_mode = #tpu.pipeline_mode<synchronous>, transform_indices = @transform_5, window_bounds = array<i64: 1, 128>}, {pipeline_mode = #tpu.pipeline_mode<synchronous>, transform_indices = @transform_6, window_bounds = array<i64: 128, 128>}, {pipeline_mode = #tpu.pipeline_mode<synchronous>, transform_indices = @transform_7, window_bounds = array<i64: 1, 128>}, {transform_indices = @transform_8, window_bounds = array<i64: 1, 3, 8>}]} {
    %c0 = arith.constant 0 : index
    %c0_0 = arith.constant 0 : index
    %0 = vector.load %arg5[%c0, %c0_0] : memref<128x128xf32, #tpu.memory_space<vmem>>, vector<128x128xf32>
    %c0_1 = arith.constant 0 : index
    %c0_2 = arith.constant 0 : index
    %1 = vector.load %arg7[%c0_1, %c0_2] : memref<128x128xf32, #tpu.memory_space<vmem>>, vector<128x128xf32>
    %c0_3 = arith.constant 0 : index
    %c0_4 = arith.constant 0 : index
    %2 = vector.load %arg6[%c0_3, %c0_4] : memref<1x128xf32, #tpu.memory_space<vmem>>, vector<1x128xf32>
    %c0_5 = arith.constant 0 : index
    %c0_6 = arith.constant 0 : index
    %3 = vector.load %arg8[%c0_5, %c0_6] : memref<1x128xf32, #tpu.memory_space<vmem>>, vector<1x128xf32>
    %c0_7 = arith.constant 0 : index
    %c0_8 = arith.constant 0 : index
    %c0_9 = arith.constant 0 : index
    %4 = vector.load %arg1[%c0_7, %c0_8, %c0_9] : memref<1x2x128xf32, #tpu.memory_space<vmem>>, vector<1x2x128xf32>
    %5 = vector.shape_cast %4 : vector<1x2x128xf32> to vector<2x128xf32>
    %cst = arith.constant dense<0.000000e+00> : vector<2x128xf32>
    %6 = tpu.matmul %5, %0, %cst {dimension_numbers = #tpu.dot_dimension_numbers<[1], [0], [0], [1], [0, 0, 1, 1], [], []>} : vector<2x128xf32>, vector<128x128xf32>, vector<2x128xf32> -> vector<2x128xf32>
    %7 = vector.broadcast %2 : vector<1x128xf32> to vector<2x128xf32>
    %8 = arith.addf %6, %7 : vector<2x128xf32>
    %9 = arith.mulf %8, %8 : vector<2x128xf32>
    %cst_10 = arith.constant dense<0.000000e+00> : vector<2xf32>
    %10 = vector.multi_reduction <add>, %9, %cst_10 [1] : vector<2x128xf32> to vector<2xf32>
    %11 = vector.shape_cast %10 : vector<2xf32> to vector<2x1xf32>
    %cst_11 = arith.constant 1.000000e-30 : f32
    %12 = vector.broadcast %cst_11 : f32 to vector<2x1xf32>
    %13 = arith.addf %11, %12 : vector<2x1xf32>
    %14 = math.rsqrt %13 : vector<2x1xf32>
    %15 = vector.broadcast %14 : vector<2x1xf32> to vector<2x128xf32>
    %16 = arith.mulf %8, %15 : vector<2x128xf32>
    %c0_12 = arith.constant 0 : index
    %c0_13 = arith.constant 0 : index
    %c0_14 = arith.constant 0 : index
    %17 = vector.load %arg2[%c0_12, %c0_13, %c0_14] : memref<1x2x128xf32, #tpu.memory_space<vmem>>, vector<1x2x128xf32>
    %18 = vector.shape_cast %17 : vector<1x2x128xf32> to vector<2x128xf32>
    %cst_15 = arith.constant dense<0.000000e+00> : vector<2x128xf32>
    %19 = tpu.matmul %18, %1, %cst_15 {dimension_numbers = #tpu.dot_dimension_numbers<[1], [0], [0], [1], [0, 0, 1, 1], [], []>} : vector<2x128xf32>, vector<128x128xf32>, vector<2x128xf32> -> vector<2x128xf32>
    %20 = vector.broadcast %3 : vector<1x128xf32> to vector<2x128xf32>
    %21 = arith.addf %19, %20 : vector<2x128xf32>
    %22 = arith.mulf %21, %21 : vector<2x128xf32>
    %cst_16 = arith.constant dense<0.000000e+00> : vector<2xf32>
    %23 = vector.multi_reduction <add>, %22, %cst_16 [1] : vector<2x128xf32> to vector<2xf32>
    %24 = vector.shape_cast %23 : vector<2xf32> to vector<2x1xf32>
    %cst_17 = arith.constant 1.000000e-30 : f32
    %25 = vector.broadcast %cst_17 : f32 to vector<2x1xf32>
    %26 = arith.addf %24, %25 : vector<2x1xf32>
    %27 = math.rsqrt %26 : vector<2x1xf32>
    %28 = vector.broadcast %27 : vector<2x1xf32> to vector<2x128xf32>
    %29 = arith.mulf %21, %28 : vector<2x128xf32>
    %c0_18 = arith.constant 0 : index
    %c0_19 = arith.constant 0 : index
    %c0_20 = arith.constant 0 : index
    %30 = vector.load %arg3[%c0_18, %c0_19, %c0_20] : memref<1x8x128xf32, #tpu.memory_space<vmem>>, vector<1x8x128xf32>
    %31 = vector.shape_cast %30 : vector<1x8x128xf32> to vector<8x128xf32>
    %cst_21 = arith.constant dense<0.000000e+00> : vector<8x128xf32>
    %32 = tpu.matmul %31, %0, %cst_21 {dimension_numbers = #tpu.dot_dimension_numbers<[1], [0], [0], [1], [0, 0, 1, 1], [], []>} : vector<8x128xf32>, vector<128x128xf32>, vector<8x128xf32> -> vector<8x128xf32>
    %33 = vector.broadcast %2 : vector<1x128xf32> to vector<8x128xf32>
    %34 = arith.addf %32, %33 : vector<8x128xf32>
    %35 = arith.mulf %34, %34 : vector<8x128xf32>
    %cst_22 = arith.constant dense<0.000000e+00> : vector<8xf32>
    %36 = vector.multi_reduction <add>, %35, %cst_22 [1] : vector<8x128xf32> to vector<8xf32>
    %37 = vector.shape_cast %36 : vector<8xf32> to vector<8x1xf32>
    %cst_23 = arith.constant 1.000000e-30 : f32
    %38 = vector.broadcast %cst_23 : f32 to vector<8x1xf32>
    %39 = arith.addf %37, %38 : vector<8x1xf32>
    %40 = math.rsqrt %39 : vector<8x1xf32>
    %41 = vector.broadcast %40 : vector<8x1xf32> to vector<8x128xf32>
    %42 = arith.mulf %34, %41 : vector<8x128xf32>
    %c0_24 = arith.constant 0 : index
    %c0_25 = arith.constant 0 : index
    %c0_26 = arith.constant 0 : index
    %43 = vector.load %arg4[%c0_24, %c0_25, %c0_26] : memref<1x8x128xf32, #tpu.memory_space<vmem>>, vector<1x8x128xf32>
    %44 = vector.shape_cast %43 : vector<1x8x128xf32> to vector<8x128xf32>
    %cst_27 = arith.constant dense<0.000000e+00> : vector<8x128xf32>
    %45 = tpu.matmul %44, %1, %cst_27 {dimension_numbers = #tpu.dot_dimension_numbers<[1], [0], [0], [1], [0, 0, 1, 1], [], []>} : vector<8x128xf32>, vector<128x128xf32>, vector<8x128xf32> -> vector<8x128xf32>
    %46 = vector.broadcast %3 : vector<1x128xf32> to vector<8x128xf32>
    %47 = arith.addf %45, %46 : vector<8x128xf32>
    %48 = arith.mulf %47, %47 : vector<8x128xf32>
    %cst_28 = arith.constant dense<0.000000e+00> : vector<8xf32>
    %49 = vector.multi_reduction <add>, %48, %cst_28 [1] : vector<8x128xf32> to vector<8xf32>
    %50 = vector.shape_cast %49 : vector<8xf32> to vector<8x1xf32>
    %cst_29 = arith.constant 1.000000e-30 : f32
    %51 = vector.broadcast %cst_29 : f32 to vector<8x1xf32>
    %52 = arith.addf %50, %51 : vector<8x1xf32>
    %53 = math.rsqrt %52 : vector<8x1xf32>
    %54 = vector.broadcast %53 : vector<8x1xf32> to vector<8x128xf32>
    %55 = arith.mulf %47, %54 : vector<8x128xf32>
    %cst_30 = arith.constant dense<0.000000e+00> : vector<2x8xf32>
    %56 = tpu.matmul %16, %55, %cst_30 {dimension_numbers = #tpu.dot_dimension_numbers<[1], [1], [0], [0], [0, 0, 1, 0], [], []>} : vector<2x128xf32>, vector<8x128xf32>, vector<2x8xf32> -> vector<2x8xf32>
    %cst_31 = arith.constant dense<0.000000e+00> : vector<2x8xf32>
    %57 = tpu.matmul %29, %42, %cst_31 {dimension_numbers = #tpu.dot_dimension_numbers<[1], [1], [0], [0], [0, 0, 1, 0], [], []>} : vector<2x128xf32>, vector<8x128xf32>, vector<2x8xf32> -> vector<2x8xf32>
    %58 = arith.mulf %16, %29 : vector<2x128xf32>
    %cst_32 = arith.constant dense<0.000000e+00> : vector<2xf32>
    %59 = vector.multi_reduction <add>, %58, %cst_32 [1] : vector<2x128xf32> to vector<2xf32>
    %60 = vector.shape_cast %59 : vector<2xf32> to vector<2x1xf32>
    %61 = tpu.iota {dimensions = array<i32: 0>} : vector<2x8xi32>
    %62 = tpu.iota {dimensions = array<i32: 1>} : vector<2x8xi32>
    %c4_i32 = arith.constant 4 : i32
    %63 = vector.broadcast %c4_i32 : i32 to vector<2x8xi32>
    %64 = arith.muli %61, %63 : vector<2x8xi32>
    %65 = arith.cmpi sge, %62, %64 : vector<2x8xi32>
    %c1_i32 = arith.constant 1 : i32
    %66 = vector.broadcast %c1_i32 : i32 to vector<2x8xi32>
    %67 = arith.addi %61, %66 : vector<2x8xi32>
    %c4_i32_33 = arith.constant 4 : i32
    %68 = vector.broadcast %c4_i32_33 : i32 to vector<2x8xi32>
    %69 = arith.muli %67, %68 : vector<2x8xi32>
    %70 = arith.cmpi slt, %62, %69 : vector<2x8xi32>
    %71 = arith.andi %65, %70 : vector<2x8xi1>
    %72 = arith.extui %71 : vector<2x8xi1> to vector<2x8xi32>
    %73 = arith.sitofp %72 : vector<2x8xi32> to vector<2x8xf32>
    %74 = vector.broadcast %60 : vector<2x1xf32> to vector<2x8xf32>
    %75 = arith.mulf %73, %74 : vector<2x8xf32>
    %cst_34 = arith.constant dense<0.000000e+00> : vector<8xf32>
    %76 = vector.multi_reduction <add>, %75, %cst_34 [0] : vector<2x8xf32> to vector<8xf32>
    %c0_35 = arith.constant 0 : index
    %c0_36 = arith.constant 0 : index
    %c0_37 = arith.constant 0 : index
    %77 = vector.load %arg9[%c0_35, %c0_36, %c0_37] : memref<1x3x8xf32, #tpu.memory_space<vmem>>, vector<1x1x8xf32>
    %78 = vector.shape_cast %77 : vector<1x1x8xf32> to vector<8xf32>
    %79 = vector.shape_cast %76 : vector<8xf32> to vector<1x1x8xf32>
    tpu.vector_store %arg9[%c0_35, %c0_36, %c0_37], %79 {strides = array<i32>} : memref<1x3x8xf32, #tpu.memory_space<vmem>>, vector<1x1x8xf32>,
    %80 = arith.mulf %73, %56 : vector<2x8xf32>
    %cst_38 = arith.constant dense<0.000000e+00> : vector<8xf32>
    %81 = vector.multi_reduction <add>, %80, %cst_38 [0] : vector<2x8xf32> to vector<8xf32>
    %c0_39 = arith.constant 0 : index
    %c1 = arith.constant 1 : index
    %c0_40 = arith.constant 0 : index
    %82 = vector.load %arg9[%c0_39, %c1, %c0_40] : memref<1x3x8xf32, #tpu.memory_space<vmem>>, vector<1x1x8xf32>
    %83 = vector.shape_cast %82 : vector<1x1x8xf32> to vector<8xf32>
    %84 = vector.shape_cast %81 : vector<8xf32> to vector<1x1x8xf32>
    tpu.vector_store %arg9[%c0_39, %c1, %c0_40], %84 {strides = array<i32>} : memref<1x3x8xf32, #tpu.memory_space<vmem>>, vector<1x1x8xf32>,
    %85 = arith.mulf %73, %57 : vector<2x8xf32>
    %cst_41 = arith.constant dense<0.000000e+00> : vector<8xf32>
    %86 = vector.multi_reduction <add>, %85, %cst_41 [0] : vector<2x8xf32> to vector<8xf32>
    %c0_42 = arith.constant 0 : index
    %c2 = arith.constant 2 : index
    %c0_43 = arith.constant 0 : index
    %87 = vector.load %arg9[%c0_42, %c2, %c0_43] : memref<1x3x8xf32, #tpu.memory_space<vmem>>, vector<1x1x8xf32>
    %88 = vector.shape_cast %87 : vector<1x1x8xf32> to vector<8xf32>
    %89 = vector.shape_cast %86 : vector<8xf32> to vector<1x1x8xf32>
    tpu.vector_store %arg9[%c0_42, %c2, %c0_43], %89 {strides = array<i32>} : memref<1x3x8xf32, #tpu.memory_space<vmem>>, vector<1x1x8xf32>,
    return
  }
  func.func @transform_0(%arg0: i32) -> (i32, i32, i32) {
    %c0_i32 = arith.constant 0 : i32
    %c0_i32_0 = arith.constant 0 : i32
    %c0_i32_1 = arith.constant 0 : i32
    return %arg0, %c0_i32, %c0_i32_0 : i32, i32, i32
  }
  func.func @transform_1(%arg0: i32) -> (i32, i32, i32) {
    %c0_i32 = arith.constant 0 : i32
    %c0_i32_0 = arith.constant 0 : i32
    %c0_i32_1 = arith.constant 0 : i32
    return %arg0, %c0_i32, %c0_i32_0 : i32, i32, i32
  }
  func.func @transform_2(%arg0: i32) -> (i32, i32, i32) {
    %c0_i32 = arith.constant 0 : i32
    %c0_i32_0 = arith.constant 0 : i32
    %c0_i32_1 = arith.constant 0 : i32
    return %arg0, %c0_i32, %c0_i32_0 : i32, i32, i32
  }
  func.func @transform_3(%arg0: i32) -> (i32, i32, i32) {
    %c0_i32 = arith.constant 0 : i32
    %c0_i32_0 = arith.constant 0 : i32
    %c0_i32_1 = arith.constant 0 : i32
    return %arg0, %c0_i32, %c0_i32_0 : i32, i32, i32
  }
  func.func @transform_4(%arg0: i32) -> (i32, i32) {
    %c0_i32 = arith.constant 0 : i32
    %c0_i32_0 = arith.constant 0 : i32
    %c0_i32_1 = arith.constant 0 : i32
    return %c0_i32, %c0_i32_0 : i32, i32
  }
  func.func @transform_5(%arg0: i32) -> (i32, i32) {
    %c0_i32 = arith.constant 0 : i32
    %c0_i32_0 = arith.constant 0 : i32
    %c0_i32_1 = arith.constant 0 : i32
    return %c0_i32, %c0_i32_0 : i32, i32
  }
  func.func @transform_6(%arg0: i32) -> (i32, i32) {
    %c0_i32 = arith.constant 0 : i32
    %c0_i32_0 = arith.constant 0 : i32
    %c0_i32_1 = arith.constant 0 : i32
    return %c0_i32, %c0_i32_0 : i32, i32
  }
  func.func @transform_7(%arg0: i32) -> (i32, i32) {
    %c0_i32 = arith.constant 0 : i32
    %c0_i32_0 = arith.constant 0 : i32
    %c0_i32_1 = arith.constant 0 : i32
    return %c0_i32, %c0_i32_0 : i32, i32
  }
  func.func @transform_8(%arg0: i32) -> (i32, i32, i32) {
    %c0_i32 = arith.constant 0 : i32
    %c0_i32_0 = arith.constant 0 : i32
    %c0_i32_1 = arith.constant 0 : i32
    return %arg0, %c0_i32, %c0_i32_0 : i32, i32, i32
  }
}

module attributes {stable_mosaic.version = 11 : i64} {
  func.func @_coco_kernel(%arg0: i32, %arg1: memref<1x2x128xf32, #tpu.memory_space<vmem>>, %arg2: memref<1x2x128xf32, #tpu.memory_space<vmem>>, %arg3: memref<1x8x128xf32, #tpu.memory_space<vmem>>, %arg4: memref<1x8x128xf32, #tpu.memory_space<vmem>>, %arg5: memref<128x128xf32, #tpu.memory_space<vmem>>, %arg6: memref<1x128xf32, #tpu.memory_space<vmem>>, %arg7: memref<128x128xf32, #tpu.memory_space<vmem>>, %arg8: memref<1x128xf32, #tpu.memory_space<vmem>>, %arg9: memref<1x3x8xf32, #tpu.memory_space<vmem>>) attributes {dimension_semantics = [#tpu.dimension_semantics<parallel>], iteration_bounds = array<i64: 1>, scalar_prefetch = 0 : i64, scratch_operands = 0 : i64, tpu.core_type = #tpu.core_type<tc>, window_params = [{transform_indices = @transform_0, window_bounds = array<i64: 1, 2, 128>}, {transform_indices = @transform_1, window_bounds = array<i64: 1, 2, 128>}, {transform_indices = @transform_2, window_bounds = array<i64: 1, 8, 128>}, {transform_indices = @transform_3, window_bounds = array<i64: 1, 8, 128>}, {pipeline_mode = #tpu.pipeline_mode<synchronous>, transform_indices = @transform_4, window_bounds = array<i64: 128, 128>}, {pipeline_mode = #tpu.pipeline_mode<synchronous>, transform_indices = @transform_5, window_bounds = array<i64: 1, 128>}, {pipeline_mode = #tpu.pipeline_mode<synchronous>, transform_indices = @transform_6, window_bounds = array<i64: 128, 128>}, {pipeline_mode = #tpu.pipeline_mode<synchronous>, transform_indices = @transform_7, window_bounds = array<i64: 1, 128>}, {transform_indices = @transform_8, window_bounds = array<i64: 1, 3, 8>}]} {
    %c0 = arith.constant 0 : index
    %c0_0 = arith.constant 0 : index
    %0 = vector.load %arg5[%c0, %c0_0] : memref<128x128xf32, #tpu.memory_space<vmem>>, vector<128x128xf32>
    %c0_1 = arith.constant 0 : index
    %c0_2 = arith.constant 0 : index
    %1 = vector.load %arg7[%c0_1, %c0_2] : memref<128x128xf32, #tpu.memory_space<vmem>>, vector<128x128xf32>
    %c0_3 = arith.constant 0 : index
    %c0_4 = arith.constant 0 : index
    %2 = vector.load %arg6[%c0_3, %c0_4] : memref<1x128xf32, #tpu.memory_space<vmem>>, vector<1x128xf32>
    %c0_5 = arith.constant 0 : index
    %c0_6 = arith.constant 0 : index
    %3 = vector.load %arg8[%c0_5, %c0_6] : memref<1x128xf32, #tpu.memory_space<vmem>>, vector<1x128xf32>
    %c0_7 = arith.constant 0 : index
    %c0_8 = arith.constant 0 : index
    %c0_9 = arith.constant 0 : index
    %4 = vector.load %arg1[%c0_7, %c0_8, %c0_9] : memref<1x2x128xf32, #tpu.memory_space<vmem>>, vector<1x2x128xf32>
    %5 = vector.shape_cast %4 : vector<1x2x128xf32> to vector<2x128xf32>
    %cst = arith.constant dense<0.000000e+00> : vector<2x128xf32>
    %6 = tpu.matmul %5, %0, %cst {dimension_numbers = #tpu.dot_dimension_numbers<[1], [0], [0], [1], [0, 0, 1, 1], [], []>} : vector<2x128xf32>, vector<128x128xf32>, vector<2x128xf32> -> vector<2x128xf32>
    %7 = vector.broadcast %2 : vector<1x128xf32> to vector<2x128xf32>
    %8 = arith.addf %6, %7 : vector<2x128xf32>
    %9 = arith.mulf %8, %8 : vector<2x128xf32>
    %cst_10 = arith.constant dense<0.000000e+00> : vector<2xf32>
    %10 = vector.multi_reduction <add>, %9, %cst_10 [1] : vector<2x128xf32> to vector<2xf32>
    %11 = vector.shape_cast %10 : vector<2xf32> to vector<2x1xf32>
    %cst_11 = arith.constant 1.000000e-30 : f32
    %12 = vector.broadcast %cst_11 : f32 to vector<2x1xf32>
    %13 = arith.addf %11, %12 : vector<2x1xf32>
    %14 = math.rsqrt %13 : vector<2x1xf32>
    %15 = vector.broadcast %14 : vector<2x1xf32> to vector<2x128xf32>
    %16 = arith.mulf %8, %15 : vector<2x128xf32>
    %c0_12 = arith.constant 0 : index
    %c0_13 = arith.constant 0 : index
    %c0_14 = arith.constant 0 : index
    %17 = vector.load %arg2[%c0_12, %c0_13, %c0_14] : memref<1x2x128xf32, #tpu.memory_space<vmem>>, vector<1x2x128xf32>
    %18 = vector.shape_cast %17 : vector<1x2x128xf32> to vector<2x128xf32>
    %cst_15 = arith.constant dense<0.000000e+00> : vector<2x128xf32>
    %19 = tpu.matmul %18, %1, %cst_15 {dimension_numbers = #tpu.dot_dimension_numbers<[1], [0], [0], [1], [0, 0, 1, 1], [], []>} : vector<2x128xf32>, vector<128x128xf32>, vector<2x128xf32> -> vector<2x128xf32>
    %20 = vector.broadcast %3 : vector<1x128xf32> to vector<2x128xf32>
    %21 = arith.addf %19, %20 : vector<2x128xf32>
    %22 = arith.mulf %21, %21 : vector<2x128xf32>
    %cst_16 = arith.constant dense<0.000000e+00> : vector<2xf32>
    %23 = vector.multi_reduction <add>, %22, %cst_16 [1] : vector<2x128xf32> to vector<2xf32>
    %24 = vector.shape_cast %23 : vector<2xf32> to vector<2x1xf32>
    %cst_17 = arith.constant 1.000000e-30 : f32
    %25 = vector.broadcast %cst_17 : f32 to vector<2x1xf32>
    %26 = arith.addf %24, %25 : vector<2x1xf32>
    %27 = math.rsqrt %26 : vector<2x1xf32>
    %28 = vector.broadcast %27 : vector<2x1xf32> to vector<2x128xf32>
    %29 = arith.mulf %21, %28 : vector<2x128xf32>
    %c0_18 = arith.constant 0 : index
    %c0_19 = arith.constant 0 : index
    %c0_20 = arith.constant 0 : index
    %30 = vector.load %arg3[%c0_18, %c0_19, %c0_20] : memref<1x8x128xf32, #tpu.memory_space<vmem>>, vector<1x8x128xf32>
    %31 = vector.shape_cast %30 : vector<1x8x128xf32> to vector<8x128xf32>
    %cst_21 = arith.constant dense<0.000000e+00> : vector<8x128xf32>
    %32 = tpu.matmul %31, %0, %cst_21 {dimension_numbers = #tpu.dot_dimension_numbers<[1], [0], [0], [1], [0, 0, 1, 1], [], []>} : vector<8x128xf32>, vector<128x128xf32>, vector<8x128xf32> -> vector<8x128xf32>
    %33 = vector.broadcast %2 : vector<1x128xf32> to vector<8x128xf32>
    %34 = arith.addf %32, %33 : vector<8x128xf32>
    %35 = arith.mulf %34, %34 : vector<8x128xf32>
    %cst_22 = arith.constant dense<0.000000e+00> : vector<8xf32>
    %36 = vector.multi_reduction <add>, %35, %cst_22 [1] : vector<8x128xf32> to vector<8xf32>
    %37 = vector.shape_cast %36 : vector<8xf32> to vector<8x1xf32>
    %cst_23 = arith.constant 1.000000e-30 : f32
    %38 = vector.broadcast %cst_23 : f32 to vector<8x1xf32>
    %39 = arith.addf %37, %38 : vector<8x1xf32>
    %40 = math.rsqrt %39 : vector<8x1xf32>
    %41 = vector.broadcast %40 : vector<8x1xf32> to vector<8x128xf32>
    %42 = arith.mulf %34, %41 : vector<8x128xf32>
    %c0_24 = arith.constant 0 : index
    %c0_25 = arith.constant 0 : index
    %c0_26 = arith.constant 0 : index
    %43 = vector.load %arg4[%c0_24, %c0_25, %c0_26] : memref<1x8x128xf32, #tpu.memory_space<vmem>>, vector<1x8x128xf32>
    %44 = vector.shape_cast %43 : vector<1x8x128xf32> to vector<8x128xf32>
    %cst_27 = arith.constant dense<0.000000e+00> : vector<8x128xf32>
    %45 = tpu.matmul %44, %1, %cst_27 {dimension_numbers = #tpu.dot_dimension_numbers<[1], [0], [0], [1], [0, 0, 1, 1], [], []>} : vector<8x128xf32>, vector<128x128xf32>, vector<8x128xf32> -> vector<8x128xf32>
    %46 = vector.broadcast %3 : vector<1x128xf32> to vector<8x128xf32>
    %47 = arith.addf %45, %46 : vector<8x128xf32>
    %48 = arith.mulf %47, %47 : vector<8x128xf32>
    %cst_28 = arith.constant dense<0.000000e+00> : vector<8xf32>
    %49 = vector.multi_reduction <add>, %48, %cst_28 [1] : vector<8x128xf32> to vector<8xf32>
    %50 = vector.shape_cast %49 : vector<8xf32> to vector<8x1xf32>
    %cst_29 = arith.constant 1.000000e-30 : f32
    %51 = vector.broadcast %cst_29 : f32 to vector<8x1xf32>
    %52 = arith.addf %50, %51 : vector<8x1xf32>
    %53 = math.rsqrt %52 : vector<8x1xf32>
    %54 = vector.broadcast %53 : vector<8x1xf32> to vector<8x128xf32>
    %55 = arith.mulf %47, %54 : vector<8x128xf32>
    %cst_30 = arith.constant dense<0.000000e+00> : vector<2x8xf32>
    %56 = tpu.matmul %16, %55, %cst_30 {dimension_numbers = #tpu.dot_dimension_numbers<[1], [1], [0], [0], [0, 0, 1, 0], [], []>} : vector<2x128xf32>, vector<8x128xf32>, vector<2x8xf32> -> vector<2x8xf32>
    %cst_31 = arith.constant dense<0.000000e+00> : vector<2x8xf32>
    %57 = tpu.matmul %29, %42, %cst_31 {dimension_numbers = #tpu.dot_dimension_numbers<[1], [1], [0], [0], [0, 0, 1, 0], [], []>} : vector<2x128xf32>, vector<8x128xf32>, vector<2x8xf32> -> vector<2x8xf32>
    %58 = arith.mulf %16, %29 : vector<2x128xf32>
    %cst_32 = arith.constant dense<0.000000e+00> : vector<2xf32>
    %59 = vector.multi_reduction <add>, %58, %cst_32 [1] : vector<2x128xf32> to vector<2xf32>
    %60 = vector.shape_cast %59 : vector<2xf32> to vector<2x1xf32>
    %61 = tpu.iota {dimensions = array<i32: 0>} : vector<2x8xi32>
    %62 = tpu.iota {dimensions = array<i32: 1>} : vector<2x8xi32>
    %c4_i32 = arith.constant 4 : i32
    %63 = vector.broadcast %c4_i32 : i32 to vector<2x8xi32>
    %64 = arith.muli %61, %63 : vector<2x8xi32>
    %65 = arith.cmpi sge, %62, %64 : vector<2x8xi32>
    %c1_i32 = arith.constant 1 : i32
    %66 = vector.broadcast %c1_i32 : i32 to vector<2x8xi32>
    %67 = arith.addi %61, %66 : vector<2x8xi32>
    %c4_i32_33 = arith.constant 4 : i32
    %68 = vector.broadcast %c4_i32_33 : i32 to vector<2x8xi32>
    %69 = arith.muli %67, %68 : vector<2x8xi32>
    %70 = arith.cmpi slt, %62, %69 : vector<2x8xi32>
    %71 = arith.andi %65, %70 : vector<2x8xi1>
    %72 = arith.extui %71 : vector<2x8xi1> to vector<2x8xi32>
    %73 = arith.sitofp %72 : vector<2x8xi32> to vector<2x8xf32>
    %74 = vector.broadcast %60 : vector<2x1xf32> to vector<2x8xf32>
    %75 = arith.mulf %73, %74 : vector<2x8xf32>
    %cst_34 = arith.constant dense<0.000000e+00> : vector<8xf32>
    %76 = vector.multi_reduction <add>, %75, %cst_34 [0] : vector<2x8xf32> to vector<8xf32>
    %c0_35 = arith.constant 0 : index
    %c0_36 = arith.constant 0 : index
    %c0_37 = arith.constant 0 : index
    %77 = vector.load %arg9[%c0_35, %c0_36, %c0_37] : memref<1x3x8xf32, #tpu.memory_space<vmem>>, vector<1x1x8xf32>
    %78 = vector.shape_cast %77 : vector<1x1x8xf32> to vector<8xf32>
    %79 = vector.shape_cast %76 : vector<8xf32> to vector<1x1x8xf32>
    tpu.vector_store %arg9[%c0_35, %c0_36, %c0_37], %79 {strides = array<i32>} : memref<1x3x8xf32, #tpu.memory_space<vmem>>, vector<1x1x8xf32>,
    %80 = arith.mulf %73, %56 : vector<2x8xf32>
    %cst_38 = arith.constant dense<0.000000e+00> : vector<8xf32>
    %81 = vector.multi_reduction <add>, %80, %cst_38 [0] : vector<2x8xf32> to vector<8xf32>
    %c0_39 = arith.constant 0 : index
    %c1 = arith.constant 1 : index
    %c0_40 = arith.constant 0 : index
    %82 = vector.load %arg9[%c0_39, %c1, %c0_40] : memref<1x3x8xf32, #tpu.memory_space<vmem>>, vector<1x1x8xf32>
    %83 = vector.shape_cast %82 : vector<1x1x8xf32> to vector<8xf32>
    %84 = vector.shape_cast %81 : vector<8xf32> to vector<1x1x8xf32>
    tpu.vector_store %arg9[%c0_39, %c1, %c0_40], %84 {strides = array<i32>} : memref<1x3x8xf32, #tpu.memory_space<vmem>>, vector<1x1x8xf32>,
    %85 = arith.mulf %73, %57 : vector<2x8xf32>
    %cst_41 = arith.constant dense<0.000000e+00> : vector<8xf32>
    %86 = vector.multi_reduction <add>, %85, %cst_41 [0] : vector<2x8xf32> to vector<8xf32>
    %c0_42 = arith.constant 0 : index
    %c2 = arith.constant 2 : index
    %c0_43 = arith.constant 0 : index
    %87 = vector.load %arg9[%c0_42, %c2, %c0_43] : memref<1x3x8xf32, #tpu.memory_space<vmem>>, vector<1x1x8xf32>
    %88 = vector.shape_cast %87 : vector<1x1x8xf32> to vector<8xf32>
    %89 = vector.shape_cast %86 : vector<8xf32> to vector<1x1x8xf32>
    tpu.vector_store %arg9[%c0_42, %c2, %c0_43], %89 {strides = array<i32>} : memref<1x3x8xf32, #tpu.memory_space<vmem>>, vector<1x1x8xf32>,
    return
  }
  func.func @transform_0(%arg0: i32) -> (i32, i32, i32) {
    %c0_i32 = arith.constant 0 : i32
    %c0_i32_0 = arith.constant 0 : i32
    %c0_i32_1 = arith.constant 0 : i32
    return %arg0, %c0_i32, %c0_i32_0 : i32, i32, i32
  }
  func.func @transform_1(%arg0: i32) -> (i32, i32, i32) {
    %c0_i32 = arith.constant 0 : i32
    %c0_i32_0 = arith.constant 0 : i32
    %c0_i32_1 = arith.constant 0 : i32
    return %arg0, %c0_i32, %c0_i32_0 : i32, i32, i32
  }
  func.func @transform_2(%arg0: i32) -> (i32, i32, i32) {
    %c0_i32 = arith.constant 0 : i32
    %c0_i32_0 = arith.constant 0 : i32
    %c0_i32_1 = arith.constant 0 : i32
    return %arg0, %c0_i32, %c0_i32_0 : i32, i32, i32
  }
  func.func @transform_3(%arg0: i32) -> (i32, i32, i32) {
    %c0_i32 = arith.constant 0 : i32
    %c0_i32_0 = arith.constant 0 : i32
    %c0_i32_1 = arith.constant 0 : i32
    return %arg0, %c0_i32, %c0_i32_0 : i32, i32, i32
  }
  func.func @transform_4(%arg0: i32) -> (i32, i32) {
    %c0_i32 = arith.constant 0 : i32
    %c0_i32_0 = arith.constant 0 : i32
    %c0_i32_1 = arith.constant 0 : i32
    return %c0_i32, %c0_i32_0 : i32, i32
  }
  func.func @transform_5(%arg0: i32) -> (i32, i32) {
    %c0_i32 = arith.constant 0 : i32
    %c0_i32_0 = arith.constant 0 : i32
    %c0_i32_1 = arith.constant 0 : i32
    return %c0_i32, %c0_i32_0 : i32, i32
  }
  func.func @transform_6(%arg0: i32) -> (i32, i32) {
    %c0_i32 = arith.constant 0 : i32
    %c0_i32_0 = arith.constant 0 : i32
    %c0_i32_1 = arith.constant 0 : i32
    return %c0_i32, %c0_i32_0 : i32, i32
  }
  func.func @transform_7(%arg0: i32) -> (i32, i32) {
    %c0_i32 = arith.constant 0 : i32
    %c0_i32_0 = arith.constant 0 : i32
    %c0_i32_1 = arith.constant 0 : i32
    return %c0_i32, %c0_i32_0 : i32, i32
  }
  func.func @transform_8(%arg0: i32) -> (i32, i32, i32) {
    %c0_i32 = arith.constant 0 : i32
    %c0_i32_0 = arith.constant 0 : i32
    %c0_i32_1 = arith.constant 0 : i32
    return %arg0, %c0_i32, %c0_i32_0 : i32, i32, i32
  }
}

</mosaic_0001>

<llo_original>
// kernel: tpu_custom_call.1
$region0: #{tpu_custom_call.1}
  #allocation0 [shape = 'u32[]', space=smem, size = 0x4, offset = 0x4, fixed_abs, tag = 'smem constant byte address 0x4 - core index']
  #allocation1 [shape = 'u32[144,128]{1,0:T(1,128)}', space=vmem, size = 0x12000, scoped, tag = 'internal scratch']
  %s0 = inlined_call_operand.hbm [shape: f32[1,2,128], index: 0, kind: input, shape index: {}]
  %s1 = inlined_call_operand.hbm [shape: f32[1,2,128], index: 1, kind: input, shape index: {}]
  %s2 = inlined_call_operand.hbm [shape: f32[1,8,128], index: 2, kind: input, shape index: {}]
  %s3 = inlined_call_operand.hbm [shape: f32[1,8,128], index: 3, kind: input, shape index: {}]
  %s4 = inlined_call_operand.hbm [shape: f32[128,128], index: 4, kind: input, shape index: {}]
  %s5 = inlined_call_operand.vmem [shape: f32[1,128], index: 5, kind: input, shape index: {}]
  %s6 = inlined_call_operand.hbm [shape: f32[128,128], index: 6, kind: input, shape index: {}]
  %s7 = inlined_call_operand.vmem [shape: f32[1,128], index: 7, kind: input, shape index: {}]
  %s8 = inlined_call_operand.vmem [shape: f32[1,3,8], index: 8, kind: output, shape index: {}]
  %s9 = sld [smem:[#allocation0]]
  $region66: #{tpu_custom_call.1} parent=0
    _
  %s11 = ssub.s32 1, %s9
  %s12 = scalar_select 0, %s11, %s9
  $region1: #{tpu_custom_call.1} parent=0
    #allocation2 [shape = 'u8[1024]{0}', space=vmem, size = 0x400, scoped, tag = 'input window, operand 0, single buffered']
    #allocation3 [shape = 's32[1]{0}', space=sflag, size = 0x4, scoped, tag = 'scoped memory for tpu_custom_call.1']
    #allocation4 [shape = 'u8[1024]{0}', space=vmem, size = 0x400, scoped, tag = 'input window, operand 1, single buffered']
    #allocation5 [shape = 's32[1]{0}', space=sflag, size = 0x4, scoped, tag = 'scoped memory for tpu_custom_call.1']
    #allocation6 [shape = 'u8[4096]{0}', space=vmem, size = 0x1000, scoped, tag = 'input window, operand 2, single buffered']
    #allocation7 [shape = 'u8[4096]{0}', space=vmem, size = 0x1000, scoped, tag = 'input window, operand 3, single buffered']
    #allocation8 [shape = 's32[1]{0}', space=sflag, size = 0x4, scoped, tag = 'scoped memory for tpu_custom_call.1']
    #allocation9 [shape = 'u8[65536]{0}', space=vmem, size = 0x10000, scoped, tag = 'input window, operand 4, single buffered']
    #allocation10 [shape = 'u8[65536]{0}', space=vmem, size = 0x10000, scoped, tag = 'input window, operand 6, single buffered']
    #allocation11 [shape = 's32[1]{0}', space=sflag, size = 0x4, scoped, tag = 'scoped memory for tpu_custom_call.1']
    %13 = vsyncpa [#allocation3], 0
    %14 = vsyncpa [#allocation5], 0
    %15 = vsyncpa [#allocation8], 0
    %16 = vsyncpa [#allocation11], 0
    // Predicated region
    $region2: #{tpu_custom_call.1} parent=1 // pred_check
      _
    $region3: #{tpu_custom_call.1} parent=1 // pred_check_branch
      %18 = sbr.rel (0) target = $region5
    $region4: #{tpu_custom_call.1} parent=1 // pred_region
      %s20 = ssub.s32 32, 32
      %21 = vsyncadd [#allocation3], %s20
      %s23 = sshll.u32 [#allocation2], 4
      %s24 = int_to_ptr.vmem [resolvable:$true] %s23
      %26 = dma.hbm_to_vmem [thread:$0]  %s0, 32, %s24, [#allocation3]
    $region5: #{tpu_custom_call.1} parent=1 // pred_fallthru
      _
    // Predicated region
    $region6: #{tpu_custom_call.1} parent=1 // pred_check
      _
    $region7: #{tpu_custom_call.1} parent=1 // pred_check_branch
      %28 = sbr.rel (0) target = $region9
    $region8: #{tpu_custom_call.1} parent=1 // pred_region
      %s30 = ssub.s32 32, 32
      %31 = vsyncadd [#allocation5], %s30
      %s33 = sshll.u32 [#allocation4], 4
      %s34 = int_to_ptr.vmem [resolvable:$true] %s33
      %36 = dma.hbm_to_vmem [thread:$0]  %s1, 32, %s34, [#allocation5]
    $region9: #{tpu_custom_call.1} parent=1 // pred_fallthru
      _
    // Predicated region
    $region10: #{tpu_custom_call.1} parent=1 // pred_check
      _
    $region11: #{tpu_custom_call.1} parent=1 // pred_check_branch
      %38 = sbr.rel (0) target = $region13
    $region12: #{tpu_custom_call.1} parent=1 // pred_region
      %s40 = ssub.s32 128, 128
      %41 = vsyncadd [#allocation5], %s40
      %s43 = sshll.u32 [#allocation6], 4
      %s44 = int_to_ptr.vmem [resolvable:$true] %s43
      %46 = dma.hbm_to_vmem [thread:$0]  %s2, 128, %s44, [#allocation5]
    $region13: #{tpu_custom_call.1} parent=1 // pred_fallthru
      _
    // Predicated region
    $region14: #{tpu_custom_call.1} parent=1 // pred_check
      _
    $region15: #{tpu_custom_call.1} parent=1 // pred_check_branch
      %48 = sbr.rel (0) target = $region17
    $region16: #{tpu_custom_call.1} parent=1 // pred_region
      %s50 = ssub.s32 128, 128
      %51 = vsyncadd [#allocation8], %s50
      %s53 = sshll.u32 [#allocation7], 4
      %s54 = int_to_ptr.vmem [resolvable:$true] %s53
      %56 = dma.hbm_to_vmem [thread:$0]  %s3, 128, %s54, [#allocation8]
    $region17: #{tpu_custom_call.1} parent=1 // pred_fallthru
      _
    // Predicated region
    $region18: #{tpu_custom_call.1} parent=1 // pred_check
      _
    $region19: #{tpu_custom_call.1} parent=1 // pred_check_branch
      %58 = sbr.rel (0) target = $region21
    $region20: #{tpu_custom_call.1} parent=1 // pred_region
      %s60 = ssub.s32 2048, 2048
      %61 = vsyncadd [#allocation8], %s60
      %s62 = sshll.u32 [#allocation9], 4
      %s63 = int_to_ptr.vmem [resolvable:$true] %s62
      %68 = dma.hbm_to_vmem [thread:$0]  %s4, 2048, %s63, [#allocation8], 128, 128, 8
    $region21: #{tpu_custom_call.1} parent=1 // pred_fallthru
      _
    // Predicated region
    $region22: #{tpu_custom_call.1} parent=1 // pred_check
      _
    $region23: #{tpu_custom_call.1} parent=1 // pred_check_branch
      %70 = sbr.rel (0) target = $region25
    $region24: #{tpu_custom_call.1} parent=1 // pred_region
      _
    $region25: #{tpu_custom_call.1} parent=1 // pred_fallthru
      _
    // Predicated region
    $region26: #{tpu_custom_call.1} parent=1 // pred_check
      _
    $region27: #{tpu_custom_call.1} parent=1 // pred_check_branch
      %72 = sbr.rel (0) target = $region29
    $region28: #{tpu_custom_call.1} parent=1 // pred_region
      %s74 = ssub.s32 2048, 2048
      %75 = vsyncadd [#allocation11], %s74
      %s76 = sshll.u32 [#allocation10], 4
      %s77 = int_to_ptr.vmem [resolvable:$true] %s76
      %82 = dma.hbm_to_vmem [thread:$0]  %s6, 2048, %s77, [#allocation11], 128, 128, 8
    $region29: #{tpu_custom_call.1} parent=1 // pred_fallthru
      _
    // Predicated region
    $region30: #{tpu_custom_call.1} parent=1 // pred_check
      _
    $region31: #{tpu_custom_call.1} parent=1 // pred_check_branch
      %84 = sbr.rel (0) target = $region33
    $region32: #{tpu_custom_call.1} parent=1 // pred_region
      _
    $region33: #{tpu_custom_call.1} parent=1 // pred_fallthru
      _
    // Predicated region
    $region34: #{tpu_custom_call.1} parent=1 // pred_check
      _
    $region35: #{tpu_custom_call.1} parent=1 // pred_check_branch
      %86 = sbr.rel (0) target = $region37
    $region36: #{tpu_custom_call.1} parent=1 // pred_region
      %87 = dma.done [#allocation3], 32
    $region37: #{tpu_custom_call.1} parent=1 // pred_fallthru
      _
    // Predicated region
    $region38: #{tpu_custom_call.1} parent=1 // pred_check
      _
    $region39: #{tpu_custom_call.1} parent=1 // pred_check_branch
      %89 = sbr.rel (0) target = $region41
    $region40: #{tpu_custom_call.1} parent=1 // pred_region
      %90 = dma.done [#allocation5], 32
    $region41: #{tpu_custom_call.1} parent=1 // pred_fallthru
      _
    // Predicated region
    $region42: #{tpu_custom_call.1} parent=1 // pred_check
      _
    $region43: #{tpu_custom_call.1} parent=1 // pred_check_branch
      %92 = sbr.rel (0) target = $region45
    $region44: #{tpu_custom_call.1} parent=1 // pred_region
      %93 = dma.done [#allocation5], 128
    $region45: #{tpu_custom_call.1} parent=1 // pred_fallthru
      _
    // Predicated region
    $region46: #{tpu_custom_call.1} parent=1 // pred_check
      _
    $region47: #{tpu_custom_call.1} parent=1 // pred_check_branch
      %95 = sbr.rel (0) target = $region49
    $region48: #{tpu_custom_call.1} parent=1 // pred_region
      %96 = dma.done [#allocation8], 128
    $region49: #{tpu_custom_call.1} parent=1 // pred_fallthru
      _
    // Predicated region
    $region50: #{tpu_custom_call.1} parent=1 // pred_check
      _
    $region51: #{tpu_custom_call.1} parent=1 // pred_check_branch
      %98 = sbr.rel (0) target = $region53
    $region52: #{tpu_custom_call.1} parent=1 // pred_region
      %99 = dma.done [#allocation8], 2048
    $region53: #{tpu_custom_call.1} parent=1 // pred_fallthru
      _
    // Predicated region
    $region54: #{tpu_custom_call.1} parent=1 // pred_check
      _
    $region55: #{tpu_custom_call.1} parent=1 // pred_check_branch
      %101 = sbr.rel (0) target = $region57
    $region56: #{tpu_custom_call.1} parent=1 // pred_region
      %102 = dma.done [#allocation11], 2048
    $region57: #{tpu_custom_call.1} parent=1 // pred_fallthru
      _
    %v103 = vld [vmem:[#allocation9] sm:$0xff]
    %v104 = vld [vmem:[#allocation9 + $0x8] sm:$0xff]
    %v105 = vld [vmem:[#allocation9 + $0x10] sm:$0xff]
    %v106 = vld [vmem:[#allocation9 + $0x18] sm:$0xff]
    %v107 = vld [vmem:[#allocation9 + $0x20] sm:$0xff]
    %v108 = vld [vmem:[#allocation9 + $0x28] sm:$0xff]
    %v109 = vld [vmem:[#allocation9 + $0x30] sm:$0xff]
    %v110 = vld [vmem:[#allocation9 + $0x38] sm:$0xff]
    %v111 = vld [vmem:[#allocation9 + $0x40] sm:$0xff]
    %v112 = vld [vmem:[#allocation9 + $0x48] sm:$0xff]
    %v113 = vld [vmem:[#allocation9 + $0x50] sm:$0xff]
    %v114 = vld [vmem:[#allocation9 + $0x58] sm:$0xff]
    %v115 = vld [vmem:[#allocation9 + $0x60] sm:$0xff]
    %v116 = vld [vmem:[#allocation9 + $0x68] sm:$0xff]
    %v117 = vld [vmem:[#allocation9 + $0x70] sm:$0xff]
    %v118 = vld [vmem:[#allocation9 + $0x78] sm:$0xff]
    %v119 = vld [vmem:[#allocation10] sm:$0xff]
    %v120 = vld [vmem:[#allocation10 + $0x8] sm:$0xff]
    %v121 = vld [vmem:[#allocation10 + $0x10] sm:$0xff]
    %v122 = vld [vmem:[#allocation10 + $0x18] sm:$0xff]
    %v123 = vld [vmem:[#allocation10 + $0x20] sm:$0xff]
    %v124 = vld [vmem:[#allocation10 + $0x28] sm:$0xff]
    %v125 = vld [vmem:[#allocation10 + $0x30] sm:$0xff]
    %v126 = vld [vmem:[#allocation10 + $0x38] sm:$0xff]
    %v127 = vld [vmem:[#allocation10 + $0x40] sm:$0xff]
    %v128 = vld [vmem:[#allocation10 + $0x48] sm:$0xff]
    %v129 = vld [vmem:[#allocation10 + $0x50] sm:$0xff]
    %v130 = vld [vmem:[#allocation10 + $0x58] sm:$0xff]
    %v131 = vld [vmem:[#allocation10 + $0x60] sm:$0xff]
    %v132 = vld [vmem:[#allocation10 + $0x68] sm:$0xff]
    %v133 = vld [vmem:[#allocation10 + $0x70] sm:$0xff]
    %v134 = vld [vmem:[#allocation10 + $0x78] sm:$0xff]
    %v135 = vld [vmem:[%s5] sm:$0x1]
    %v136 = vld [vmem:[%s7] sm:$0x1]
    %v137 = vld [vmem:[#allocation2] sm:$0x3]
    %v139 = vlaneseq
    %v140 = vshrl.u32 %v139, 7
    %v141 = vsub.s32 0, %v140
    %v142 = vrot.slane %v135, %v141
    %144 = vmatprep.subr.mxu0 0.0
    %145 = vmatpush1.msra.mxu0 %v118
    %146 = vmatprep.subr.mxu0 0.0
    %147 = vmatpush1.msra.mxu0 %v117
    %148 = vmatprep.subr.mxu0 0.0
    %149 = vmatpush1.msra.mxu0 %v116
    %150 = vmatprep.subr.mxu0 0.0
    %151 = vmatpush1.msra.mxu0 %v115
    %152 = vmatprep.subr.mxu0 0.0
    %153 = vmatpush1.msra.mxu0 %v114
    %154 = vmatprep.subr.mxu0 0.0
    %155 = vmatpush1.msra.mxu0 %v113
    %156 = vmatprep.subr.mxu0 0.0
    %157 = vmatpush1.msra.mxu0 %v112
    %158 = vmatprep.subr.mxu0 0.0
    %159 = vmatpush1.msra.mxu0 %v111
    %160 = vmatprep.subr.mxu0 0.0
    %161 = vmatpush1.msra.mxu0 %v110
    %162 = vmatprep.subr.mxu0 0.0
    %163 = vmatpush1.msra.mxu0 %v109
    %164 = vmatprep.subr.mxu0 0.0
    %165 = vmatpush1.msra.mxu0 %v108
    %166 = vmatprep.subr.mxu0 0.0
    %167 = vmatpush1.msra.mxu0 %v107
    %168 = vmatprep.subr.mxu0 0.0
    %169 = vmatpush1.msra.mxu0 %v106
    %170 = vmatprep.subr.mxu0 0.0
    %171 = vmatpush1.msra.mxu0 %v105
    %172 = vmatprep.subr.mxu0 0.0
    %173 = vmatpush1.msra.mxu0 %v104
    %174 = vmatprep.subr.mxu0 0.0
    %175 = vmatpush1.msra.mxu0 %v103
    %176 = vmatprep.subr.mxu0 0.0
    %177 = vmatpush2.msra.mxu0 0.0
    %178 = vmatprep.subr.mxu0 0.0
    %179 = vmatpush2.msra.mxu0 0.0
    %180 = vmatprep.subr.mxu0 0.0
    %181 = vmatpush2.msra.mxu0 0.0
    %182 = vmatprep.subr.mxu0 0.0
    %183 = vmatpush2.msra.mxu0 0.0
    %184 = vmatprep.subr.mxu0 0.0
    %185 = vmatpush2.msra.mxu0 0.0
    %186 = vmatprep.subr.mxu0 0.0
    %187 = vmatpush2.msra.mxu0 0.0
    %188 = vmatprep.subr.mxu0 0.0
    %189 = vmatpush2.msra.mxu0 0.0
    %190 = vmatprep.subr.mxu0 0.0
    %191 = vmatpush2.msra.mxu0 0.0
    %192 = vmatprep.subr.mxu0 0.0
    %193 = vmatpush2.msra.mxu0 0.0
    %194 = vmatprep.subr.mxu0 0.0
    %195 = vmatpush2.msra.mxu0 0.0
    %196 = vmatprep.subr.mxu0 0.0
    %197 = vmatpush2.msra.mxu0 0.0
    %198 = vmatprep.subr.mxu0 0.0
    %199 = vmatpush2.msra.mxu0 0.0
    %200 = vmatprep.subr.mxu0 0.0
    %201 = vmatpush2.msra.mxu0 0.0
    %202 = vmatprep.subr.mxu0 0.0
    %203 = vmatpush2.msra.mxu0 0.0
    %204 = vmatprep.subr.mxu0 0.0
    %205 = vmatpush2.msra.mxu0 0.0
    %206 = vmatprep.subr.mxu0 0.0
    %207 = vmatpush2.msra.mxu0 0.0
    %208 = vmatprep.mubr.f32.mxu0 0.0
    %209 = vmatmul.mubr.f32.gmra.mxu0 %v137
    %v210 = vpop.f32.mrf.mxu0
    %v211 = vadd.f32 %v142, %v210
    %v212 = vpop.f32.mrf.mxu0
    %213 = vdwg.mxu0
    %v214 = vmul.f32 %v211, %v211
    %vm215 = vcmask 1041408
    %v216 = vsel %vm215, %v214, 0.0
    %217 = vadd.xlane.f32.xlu0 %v216
    %v218 = vpop.xlane.xlu0 %217
    %v219 = vadd.f32 %v218, 1e-30
    %v220 = vrsqrt.pop %v219
    %v221 = vmul.f32 %v211, %v220
    %v222 = vld [vmem:[#allocation4] sm:$0x3]
    %v224 = vlaneseq
    %v225 = vshrl.u32 %v224, 7
    %v226 = vsub.s32 0, %v225
    %v227 = vrot.slane %v136, %v226
    %229 = vmatprep.subr.mxu0 0.0
    %230 = vmatpush1.msra.mxu0 %v134
    %231 = vmatprep.subr.mxu0 0.0
    %232 = vmatpush1.msra.mxu0 %v133
    %233 = vmatprep.subr.mxu0 0.0
    %234 = vmatpush1.msra.mxu0 %v132
    %235 = vmatprep.subr.mxu0 0.0
    %236 = vmatpush1.msra.mxu0 %v131
    %237 = vmatprep.subr.mxu0 0.0
    %238 = vmatpush1.msra.mxu0 %v130
    %239 = vmatprep.subr.mxu0 0.0
    %240 = vmatpush1.msra.mxu0 %v129
    %241 = vmatprep.subr.mxu0 0.0
    %242 = vmatpush1.msra.mxu0 %v128
    %243 = vmatprep.subr.mxu0 0.0
    %244 = vmatpush1.msra.mxu0 %v127
    %245 = vmatprep.subr.mxu0 0.0
    %246 = vmatpush1.msra.mxu0 %v126
    %247 = vmatprep.subr.mxu0 0.0
    %248 = vmatpush1.msra.mxu0 %v125
    %249 = vmatprep.subr.mxu0 0.0
    %250 = vmatpush1.msra.mxu0 %v124
    %251 = vmatprep.subr.mxu0 0.0
    %252 = vmatpush1.msra.mxu0 %v123
    %253 = vmatprep.subr.mxu0 0.0
    %254 = vmatpush1.msra.mxu0 %v122
    %255 = vmatprep.subr.mxu0 0.0
    %256 = vmatpush1.msra.mxu0 %v121
    %257 = vmatprep.subr.mxu0 0.0
    %258 = vmatpush1.msra.mxu0 %v120
    %259 = vmatprep.subr.mxu0 0.0
    %260 = vmatpush1.msra.mxu0 %v119
    %261 = vmatprep.subr.mxu0 0.0
    %262 = vmatpush2.msra.mxu0 0.0
    %263 = vmatprep.subr.mxu0 0.0
    %264 = vmatpush2.msra.mxu0 0.0
    %265 = vmatprep.subr.mxu0 0.0
    %266 = vmatpush2.msra.mxu0 0.0
    %267 = vmatprep.subr.mxu0 0.0
    %268 = vmatpush2.msra.mxu0 0.0
    %269 = vmatprep.subr.mxu0 0.0
    %270 = vmatpush2.msra.mxu0 0.0
    %271 = vmatprep.subr.mxu0 0.0
    %272 = vmatpush2.msra.mxu0 0.0
    %273 = vmatprep.subr.mxu0 0.0
    %274 = vmatpush2.msra.mxu0 0.0
    %275 = vmatprep.subr.mxu0 0.0
    %276 = vmatpush2.msra.mxu0 0.0
    %277 = vmatprep.subr.mxu0 0.0
    %278 = vmatpush2.msra.mxu0 0.0
    %279 = vmatprep.subr.mxu0 0.0
    %280 = vmatpush2.msra.mxu0 0.0
    %281 = vmatprep.subr.mxu0 0.0
    %282 = vmatpush2.msra.mxu0 0.0
    %283 = vmatprep.subr.mxu0 0.0
    %284 = vmatpush2.msra.mxu0 0.0
    %285 = vmatprep.subr.mxu0 0.0
    %286 = vmatpush2.msra.mxu0 0.0
    %287 = vmatprep.subr.mxu0 0.0
    %288 = vmatpush2.msra.mxu0 0.0
    %289 = vmatprep.subr.mxu0 0.0
    %290 = vmatpush2.msra.mxu0 0.0
    %291 = vmatprep.subr.mxu0 0.0
    %292 = vmatpush2.msra.mxu0 0.0
    %293 = vmatprep.mubr.f32.mxu0 0.0
    %294 = vmatmul.mubr.f32.gmra.mxu0 %v222
    %v295 = vpop.f32.mrf.mxu0
    %v296 = vadd.f32 %v227, %v295
    %v297 = vpop.f32.mrf.mxu0
    %298 = vdwg.mxu0
    %v299 = vmul.f32 %v296, %v296
    %v300 = vsel %vm215, %v299, 0.0
    %301 = vadd.xlane.f32.xlu0 %v300
    %v302 = vpop.xlane.xlu0 %301
    %v303 = vadd.f32 %v302, 1e-30
    %v304 = vrsqrt.pop %v303
    %v305 = vmul.f32 %v296, %v304
    %v306 = vld [vmem:[#allocation6] sm:$0xff]
    %307 = vmatprep.subr.mxu0 0.0
    %308 = vmatpush1.msra.mxu0 %v118
    %309 = vmatprep.subr.mxu0 0.0
    %310 = vmatpush1.msra.mxu0 %v117
    %311 = vmatprep.subr.mxu0 0.0
    %312 = vmatpush1.msra.mxu0 %v116
    %313 = vmatprep.subr.mxu0 0.0
    %314 = vmatpush1.msra.mxu0 %v115
    %315 = vmatprep.subr.mxu0 0.0
    %316 = vmatpush1.msra.mxu0 %v114
    %317 = vmatprep.subr.mxu0 0.0
    %318 = vmatpush1.msra.mxu0 %v113
    %319 = vmatprep.subr.mxu0 0.0
    %320 = vmatpush1.msra.mxu0 %v112
    %321 = vmatprep.subr.mxu0 0.0
    %322 = vmatpush1.msra.mxu0 %v111
    %323 = vmatprep.subr.mxu0 0.0
    %324 = vmatpush1.msra.mxu0 %v110
    %325 = vmatprep.subr.mxu0 0.0
    %326 = vmatpush1.msra.mxu0 %v109
    %327 = vmatprep.subr.mxu0 0.0
    %328 = vmatpush1.msra.mxu0 %v108
    %329 = vmatprep.subr.mxu0 0.0
    %330 = vmatpush1.msra.mxu0 %v107
    %331 = vmatprep.subr.mxu0 0.0
    %332 = vmatpush1.msra.mxu0 %v106
    %333 = vmatprep.subr.mxu0 0.0
    %334 = vmatpush1.msra.mxu0 %v105
    %335 = vmatprep.subr.mxu0 0.0
    %336 = vmatpush1.msra.mxu0 %v104
    %337 = vmatprep.subr.mxu0 0.0
    %338 = vmatpush1.msra.mxu0 %v103
    %339 = vmatprep.subr.mxu0 0.0
    %340 = vmatpush2.msra.mxu0 0.0
    %341 = vmatprep.subr.mxu0 0.0
    %342 = vmatpush2.msra.mxu0 0.0
    %343 = vmatprep.subr.mxu0 0.0
    %344 = vmatpush2.msra.mxu0 0.0
    %345 = vmatprep.subr.mxu0 0.0
    %346 = vmatpush2.msra.mxu0 0.0
    %347 = vmatprep.subr.mxu0 0.0
    %348 = vmatpush2.msra.mxu0 0.0
    %349 = vmatprep.subr.mxu0 0.0
    %350 = vmatpush2.msra.mxu0 0.0
    %351 = vmatprep.subr.mxu0 0.0
    %352 = vmatpush2.msra.mxu0 0.0
    %353 = vmatprep.subr.mxu0 0.0
    %354 = vmatpush2.msra.mxu0 0.0
    %355 = vmatprep.subr.mxu0 0.0
    %356 = vmatpush2.msra.mxu0 0.0
    %357 = vmatprep.subr.mxu0 0.0
    %358 = vmatpush2.msra.mxu0 0.0
    %359 = vmatprep.subr.mxu0 0.0
    %360 = vmatpush2.msra.mxu0 0.0
    %361 = vmatprep.subr.mxu0 0.0
    %362 = vmatpush2.msra.mxu0 0.0
    %363 = vmatprep.subr.mxu0 0.0
    %364 = vmatpush2.msra.mxu0 0.0
    %365 = vmatprep.subr.mxu0 0.0
    %366 = vmatpush2.msra.mxu0 0.0
    %367 = vmatprep.subr.mxu0 0.0
    %368 = vmatpush2.msra.mxu0 0.0
    %369 = vmatprep.subr.mxu0 0.0
    %370 = vmatpush2.msra.mxu0 0.0
    %371 = vmatprep.mubr.f32.mxu0 0.0
    %372 = vmatmul.mubr.f32.gmra.mxu0 %v306
    %v373 = vpop.f32.mrf.mxu0
    %v374 = vadd.f32 %v142, %v373
    %v375 = vpop.f32.mrf.mxu0
    %376 = vdwg.mxu0
    %v377 = vmul.f32 %v374, %v374
    %378 = vadd.xlane.f32.xlu0 %v377
    %v379 = vpop.xlane.xlu0 %378
    %v380 = vadd.f32 %v379, 1e-30
    %v381 = vrsqrt.pop %v380
    %v382 = vmul.f32 %v374, %v381
    %v383 = vld [vmem:[#allocation7] sm:$0xff]
    %384 = vmatprep.subr.mxu0 0.0
    %385 = vmatpush1.msra.mxu0 %v134
    %386 = vmatprep.subr.mxu0 0.0
    %387 = vmatpush1.msra.mxu0 %v133
    %388 = vmatprep.subr.mxu0 0.0
    %389 = vmatpush1.msra.mxu0 %v132
    %390 = vmatprep.subr.mxu0 0.0
    %391 = vmatpush1.msra.mxu0 %v131
    %392 = vmatprep.subr.mxu0 0.0
    %393 = vmatpush1.msra.mxu0 %v130
    %394 = vmatprep.subr.mxu0 0.0
    %395 = vmatpush1.msra.mxu0 %v129
    %396 = vmatprep.subr.mxu0 0.0
    %397 = vmatpush1.msra.mxu0 %v128
    %398 = vmatprep.subr.mxu0 0.0
    %399 = vmatpush1.msra.mxu0 %v127
    %400 = vmatprep.subr.mxu0 0.0
    %401 = vmatpush1.msra.mxu0 %v126
    %402 = vmatprep.subr.mxu0 0.0
    %403 = vmatpush1.msra.mxu0 %v125
    %404 = vmatprep.subr.mxu0 0.0
    %405 = vmatpush1.msra.mxu0 %v124
    %406 = vmatprep.subr.mxu0 0.0
    %407 = vmatpush1.msra.mxu0 %v123
    %408 = vmatprep.subr.mxu0 0.0
    %409 = vmatpush1.msra.mxu0 %v122
    %410 = vmatprep.subr.mxu0 0.0
    %411 = vmatpush1.msra.mxu0 %v121
    %412 = vmatprep.subr.mxu0 0.0
    %413 = vmatpush1.msra.mxu0 %v120
    %414 = vmatprep.subr.mxu0 0.0
    %415 = vmatpush1.msra.mxu0 %v119
    %416 = vmatprep.subr.mxu0 0.0
    %417 = vmatpush2.msra.mxu0 0.0
    %418 = vmatprep.subr.mxu0 0.0
    %419 = vmatpush2.msra.mxu0 0.0
    %420 = vmatprep.subr.mxu0 0.0
    %421 = vmatpush2.msra.mxu0 0.0
    %422 = vmatprep.subr.mxu0 0.0
    %423 = vmatpush2.msra.mxu0 0.0
    %424 = vmatprep.subr.mxu0 0.0
    %425 = vmatpush2.msra.mxu0 0.0
    %426 = vmatprep.subr.mxu0 0.0
    %427 = vmatpush2.msra.mxu0 0.0
    %428 = vmatprep.subr.mxu0 0.0
    %429 = vmatpush2.msra.mxu0 0.0
    %430 = vmatprep.subr.mxu0 0.0
    %431 = vmatpush2.msra.mxu0 0.0
    %432 = vmatprep.subr.mxu0 0.0
    %433 = vmatpush2.msra.mxu0 0.0
    %434 = vmatprep.subr.mxu0 0.0
    %435 = vmatpush2.msra.mxu0 0.0
    %436 = vmatprep.subr.mxu0 0.0
    %437 = vmatpush2.msra.mxu0 0.0
    %438 = vmatprep.subr.mxu0 0.0
    %439 = vmatpush2.msra.mxu0 0.0
    %440 = vmatprep.subr.mxu0 0.0
    %441 = vmatpush2.msra.mxu0 0.0
    %442 = vmatprep.subr.mxu0 0.0
    %443 = vmatpush2.msra.mxu0 0.0
    %444 = vmatprep.subr.mxu0 0.0
    %445 = vmatpush2.msra.mxu0 0.0
    %446 = vmatprep.subr.mxu0 0.0
    %447 = vmatpush2.msra.mxu0 0.0
    %448 = vmatprep.mubr.f32.mxu0 0.0
    %449 = vmatmul.mubr.f32.gmra.mxu0 %v383
    %v450 = vpop.f32.mrf.mxu0
    %v451 = vadd.f32 %v227, %v450
    %v452 = vpop.f32.mrf.mxu0
    %453 = vdwg.mxu0
    %v454 = vmul.f32 %v451, %v451
    %455 = vadd.xlane.f32.xlu0 %v454
    %v456 = vpop.xlane.xlu0 %455
    %v457 = vadd.f32 %v456, 1e-30
    %v458 = vrsqrt.pop %v457
    %v459 = vmul.f32 %v451, %v458
    %460 = vmatprep.subr.mxu0 0.0
    %461 = vmatpush1.xpose.msra.mxu0 0.0
    %462 = vmatprep.subr.mxu0 0.0
    %463 = vmatpush1.xpose.msra.mxu0 0.0
    %464 = vmatprep.subr.mxu0 0.0
    %465 = vmatpush1.xpose.msra.mxu0 0.0
    %466 = vmatprep.subr.mxu0 0.0
    %467 = vmatpush1.xpose.msra.mxu0 0.0
    %468 = vmatprep.subr.mxu0 0.0
    %469 = vmatpush1.xpose.msra.mxu0 0.0
    %470 = vmatprep.subr.mxu0 0.0
    %471 = vmatpush1.xpose.msra.mxu0 0.0
    %472 = vmatprep.subr.mxu0 0.0
    %473 = vmatpush1.xpose.msra.mxu0 0.0
    %474 = vmatprep.subr.mxu0 0.0
    %475 = vmatpush1.xpose.msra.mxu0 0.0
    %476 = vmatprep.subr.mxu0 0.0
    %477 = vmatpush1.xpose.msra.mxu0 0.0
    %478 = vmatprep.subr.mxu0 0.0
    %479 = vmatpush1.xpose.msra.mxu0 0.0
    %480 = vmatprep.subr.mxu0 0.0
    %481 = vmatpush1.xpose.msra.mxu0 0.0
    %482 = vmatprep.subr.mxu0 0.0
    %483 = vmatpush1.xpose.msra.mxu0 0.0
    %484 = vmatprep.subr.mxu0 0.0
    %485 = vmatpush1.xpose.msra.mxu0 0.0
    %486 = vmatprep.subr.mxu0 0.0
    %487 = vmatpush1.xpose.msra.mxu0 0.0
    %488 = vmatprep.subr.mxu0 0.0
    %489 = vmatpush1.xpose.msra.mxu0 0.0
    %490 = vmatprep.subr.mxu0 0.0
    %491 = vmatpush1.xpose.msra.mxu0 %v459
    %492 = vmatprep.subr.mxu0 0.0
    %493 = vmatpush2.xpose.msra.mxu0 0.0
    %494 = vmatprep.subr.mxu0 0.0
    %495 = vmatpush2.xpose.msra.mxu0 0.0
    %496 = vmatprep.subr.mxu0 0.0
    %497 = vmatpush2.xpose.msra.mxu0 0.0
    %498 = vmatprep.subr.mxu0 0.0
    %499 = vmatpush2.xpose.msra.mxu0 0.0
    %500 = vmatprep.subr.mxu0 0.0
    %501 = vmatpush2.xpose.msra.mxu0 0.0
    %502 = vmatprep.subr.mxu0 0.0
    %503 = vmatpush2.xpose.msra.mxu0 0.0
    %504 = vmatprep.subr.mxu0 0.0
    %505 = vmatpush2.xpose.msra.mxu0 0.0
    %506 = vmatprep.subr.mxu0 0.0
    %507 = vmatpush2.xpose.msra.mxu0 0.0
    %508 = vmatprep.subr.mxu0 0.0
    %509 = vmatpush2.xpose.msra.mxu0 0.0
    %510 = vmatprep.subr.mxu0 0.0
    %511 = vmatpush2.xpose.msra.mxu0 0.0
    %512 = vmatprep.subr.mxu0 0.0
    %513 = vmatpush2.xpose.msra.mxu0 0.0
    %514 = vmatprep.subr.mxu0 0.0
    %515 = vmatpush2.xpose.msra.mxu0 0.0
    %516 = vmatprep.subr.mxu0 0.0
    %517 = vmatpush2.xpose.msra.mxu0 0.0
    %518 = vmatprep.subr.mxu0 0.0
    %519 = vmatpush2.xpose.msra.mxu0 0.0
    %520 = vmatprep.subr.mxu0 0.0
    %521 = vmatpush2.xpose.msra.mxu0 0.0
    %522 = vmatprep.subr.mxu0 0.0
    %523 = vmatpush2.xpose.msra.mxu0 0.0
    %524 = vmatprep.mubr.f32.mxu0 0.0
    %525 = vmatmul.mubr.f32.gmra.mxu0 %v221
    %v526 = vpop.f32.mrf.mxu0
    %v527 = vadd.f32 0.0, %v526
    %v528 = vpop.f32.mrf.mxu0
    %529 = vdwg.mxu0
    %530 = vmatprep.subr.mxu0 0.0
    %531 = vmatpush1.xpose.msra.mxu0 0.0
    %532 = vmatprep.subr.mxu0 0.0
    %533 = vmatpush1.xpose.msra.mxu0 0.0
    %534 = vmatprep.subr.mxu0 0.0
    %535 = vmatpush1.xpose.msra.mxu0 0.0
    %536 = vmatprep.subr.mxu0 0.0
    %537 = vmatpush1.xpose.msra.mxu0 0.0
    %538 = vmatprep.subr.mxu0 0.0
    %539 = vmatpush1.xpose.msra.mxu0 0.0
    %540 = vmatprep.subr.mxu0 0.0
    %541 = vmatpush1.xpose.msra.mxu0 0.0
    %542 = vmatprep.subr.mxu0 0.0
    %543 = vmatpush1.xpose.msra.mxu0 0.0
    %544 = vmatprep.subr.mxu0 0.0
    %545 = vmatpush1.xpose.msra.mxu0 0.0
    %546 = vmatprep.subr.mxu0 0.0
    %547 = vmatpush1.xpose.msra.mxu0 0.0
    %548 = vmatprep.subr.mxu0 0.0
    %549 = vmatpush1.xpose.msra.mxu0 0.0
    %550 = vmatprep.subr.mxu0 0.0
    %551 = vmatpush1.xpose.msra.mxu0 0.0
    %552 = vmatprep.subr.mxu0 0.0
    %553 = vmatpush1.xpose.msra.mxu0 0.0
    %554 = vmatprep.subr.mxu0 0.0
    %555 = vmatpush1.xpose.msra.mxu0 0.0
    %556 = vmatprep.subr.mxu0 0.0
    %557 = vmatpush1.xpose.msra.mxu0 0.0
    %558 = vmatprep.subr.mxu0 0.0
    %559 = vmatpush1.xpose.msra.mxu0 0.0
    %560 = vmatprep.subr.mxu0 0.0
    %561 = vmatpush1.xpose.msra.mxu0 %v382
    %562 = vmatprep.subr.mxu0 0.0
    %563 = vmatpush2.xpose.msra.mxu0 0.0
    %564 = vmatprep.subr.mxu0 0.0
    %565 = vmatpush2.xpose.msra.mxu0 0.0
    %566 = vmatprep.subr.mxu0 0.0
    %567 = vmatpush2.xpose.msra.mxu0 0.0
    %568 = vmatprep.subr.mxu0 0.0
    %569 = vmatpush2.xpose.msra.mxu0 0.0
    %570 = vmatprep.subr.mxu0 0.0
    %571 = vmatpush2.xpose.msra.mxu0 0.0
    %572 = vmatprep.subr.mxu0 0.0
    %573 = vmatpush2.xpose.msra.mxu0 0.0
    %574 = vmatprep.subr.mxu0 0.0
    %575 = vmatpush2.xpose.msra.mxu0 0.0
    %576 = vmatprep.subr.mxu0 0.0
    %577 = vmatpush2.xpose.msra.mxu0 0.0
    %578 = vmatprep.subr.mxu0 0.0
    %579 = vmatpush2.xpose.msra.mxu0 0.0
    %580 = vmatprep.subr.mxu0 0.0
    %581 = vmatpush2.xpose.msra.mxu0 0.0
    %582 = vmatprep.subr.mxu0 0.0
    %583 = vmatpush2.xpose.msra.mxu0 0.0
    %584 = vmatprep.subr.mxu0 0.0
    %585 = vmatpush2.xpose.msra.mxu0 0.0
    %586 = vmatprep.subr.mxu0 0.0
    %587 = vmatpush2.xpose.msra.mxu0 0.0
    %588 = vmatprep.subr.mxu0 0.0
    %589 = vmatpush2.xpose.msra.mxu0 0.0
    %590 = vmatprep.subr.mxu0 0.0
    %591 = vmatpush2.xpose.msra.mxu0 0.0
    %592 = vmatprep.subr.mxu0 0.0
    %593 = vmatpush2.xpose.msra.mxu0 0.0
    %594 = vmatprep.mubr.f32.mxu0 0.0
    %595 = vmatmul.mubr.f32.gmra.mxu0 %v305
    %v596 = vpop.f32.mrf.mxu0
    %v597 = vadd.f32 0.0, %v596
    %v598 = vpop.f32.mrf.mxu0
    %599 = vdwg.mxu0
    %v600 = vmul.f32 %v221, %v305
    %v601 = vsel %vm215, %v600, 0.0
    %602 = vadd.xlane.f32.xlu0 %v601
    %v603 = vpop.xlane.xlu0 %602
    %v604 = vlaneseq
    %v605 = vshrl.u32 %v604, 7
    %v606 = vlaneseq
    %v607 = vand.u32 %v606, 127
    %v608 = vmul.u32 %v605, 4
    %vm609 = vcmp.ge.s32.totalorder %v607, %v608
    %v610 = vadd.s32 %v605, 1
    %v611 = vmul.u32 %v610, 4
    %vm612 = vcmp.lt.s32.totalorder %v607, %v611
    %vm613 = vmand %vm609, %vm612
    %v614 = vsel %vm613, 1, 0
    %v615 = vcvt.s32.f32 %v614
    %v616 = vmul.f32 %v615, %v603
    %vm617 = vcmask 58368
    %v618 = vsel %vm617, %v616, 0.0
    %v619 = vrot.slane %v618, 4
    %v620 = vadd.f32 %v618, %v619
    %v621 = vrot.slane %v620, 2
    %v622 = vadd.f32 %v620, %v621
    %v623 = vrot.slane %v622, 1
    %v624 = vadd.f32 %v622, %v623
    %vm625 = vcmask 57344
    %626 = vst.msk [vmem:[%s8] sm:$0x1] %vm625, %v624
    %v627 = vmul.f32 %v615, %v527
    %v628 = vsel %vm617, %v627, 0.0
    %v629 = vrot.slane %v628, 4
    %v630 = vadd.f32 %v628, %v629
    %v631 = vrot.slane %v630, 2
    %v632 = vadd.f32 %v630, %v631
    %v633 = vrot.slane %v632, 1
    %v634 = vadd.f32 %v632, %v633
    %635 = vst.msk [vmem:[%s8 + $0x1] sm:$0x1] %vm625, %v634
    %v636 = vmul.f32 %v615, %v597
    %v637 = vsel %vm617, %v636, 0.0
    %v638 = vrot.slane %v637, 4
    %v639 = vadd.f32 %v637, %v638
    %v640 = vrot.slane %v639, 2
    %v641 = vadd.f32 %v639, %v640
    %v642 = vrot.slane %v641, 1
    %v643 = vadd.f32 %v641, %v642
    %644 = vst.msk [vmem:[%s8 + $0x2] sm:$0x1] %vm625, %v643
    // Predicated region
    $region58: #{tpu_custom_call.1} parent=1 // pred_check
      _
    $region59: #{tpu_custom_call.1} parent=1 // pred_check_branch
      %646 = sbr.rel (0) target = $region61
    $region60: #{tpu_custom_call.1} parent=1 // pred_region
      _
    $region61: #{tpu_custom_call.1} parent=1 // pred_fallthru
      _
    // Predicated region
    $region62: #{tpu_custom_call.1} parent=1 // pred_check
      _
    $region63: #{tpu_custom_call.1} parent=1 // pred_check_branch
      %648 = sbr.rel (0) target = $region65
    $region64: #{tpu_custom_call.1} parent=1 // pred_region
      _
    $region65: #{tpu_custom_call.1} parent=1 // pred_fallthru
      _
    %649 = vsyncpa [#allocation3], 1
    %650 = vsyncpa [#allocation5], 1
    %651 = vsyncpa [#allocation8], 1
    %652 = vsyncpa [#allocation11], 1

// kernel: tpu_custom_call.1
$region0: #{tpu_custom_call.1}
  #allocation0 [shape = 'u32[]', space=smem, size = 0x4, offset = 0x4, fixed_abs, tag = 'smem constant byte address 0x4 - core index']
  #allocation1 [shape = 'u32[144,128]{1,0:T(1,128)}', space=vmem, size = 0x12000, scoped, tag = 'internal scratch']
  %s0 = inlined_call_operand.hbm [shape: f32[1,2,128], index: 0, kind: input, shape index: {}]
  %s1 = inlined_call_operand.hbm [shape: f32[1,2,128], index: 1, kind: input, shape index: {}]
  %s2 = inlined_call_operand.hbm [shape: f32[1,8,128], index: 2, kind: input, shape index: {}]
  %s3 = inlined_call_operand.hbm [shape: f32[1,8,128], index: 3, kind: input, shape index: {}]
  %s4 = inlined_call_operand.hbm [shape: f32[128,128], index: 4, kind: input, shape index: {}]
  %s5 = inlined_call_operand.vmem [shape: f32[1,128], index: 5, kind: input, shape index: {}]
  %s6 = inlined_call_operand.hbm [shape: f32[128,128], index: 6, kind: input, shape index: {}]
  %s7 = inlined_call_operand.vmem [shape: f32[1,128], index: 7, kind: input, shape index: {}]
  %s8 = inlined_call_operand.vmem [shape: f32[1,3,8], index: 8, kind: output, shape index: {}]
  %s9 = sld [smem:[#allocation0]]
  $region66: #{tpu_custom_call.1} parent=0
    _
  %s11 = ssub.s32 1, %s9
  %s12 = scalar_select 0, %s11, %s9
  $region1: #{tpu_custom_call.1} parent=0
    #allocation2 [shape = 'u8[1024]{0}', space=vmem, size = 0x400, scoped, tag = 'input window, operand 0, single buffered']
    #allocation3 [shape = 's32[1]{0}', space=sflag, size = 0x4, scoped, tag = 'scoped memory for tpu_custom_call.1']
    #allocation4 [shape = 'u8[1024]{0}', space=vmem, size = 0x400, scoped, tag = 'input window, operand 1, single buffered']
    #allocation5 [shape = 's32[1]{0}', space=sflag, size = 0x4, scoped, tag = 'scoped memory for tpu_custom_call.1']
    #allocation6 [shape = 'u8[4096]{0}', space=vmem, size = 0x1000, scoped, tag = 'input window, operand 2, single buffered']
    #allocation7 [shape = 'u8[4096]{0}', space=vmem, size = 0x1000, scoped, tag = 'input window, operand 3, single buffered']
    #allocation8 [shape = 's32[1]{0}', space=sflag, size = 0x4, scoped, tag = 'scoped memory for tpu_custom_call.1']
    #allocation9 [shape = 'u8[65536]{0}', space=vmem, size = 0x10000, scoped, tag = 'input window, operand 4, single buffered']
    #allocation10 [shape = 'u8[65536]{0}', space=vmem, size = 0x10000, scoped, tag = 'input window, operand 6, single buffered']
    #allocation11 [shape = 's32[1]{0}', space=sflag, size = 0x4, scoped, tag = 'scoped memory for tpu_custom_call.1']
    %13 = vsyncpa [#allocation3], 0
    %14 = vsyncpa [#allocation5], 0
    %15 = vsyncpa [#allocation8], 0
    %16 = vsyncpa [#allocation11], 0
    // Predicated region
    $region2: #{tpu_custom_call.1} parent=1 // pred_check
      _
    $region3: #{tpu_custom_call.1} parent=1 // pred_check_branch
      %18 = sbr.rel (0) target = $region5
    $region4: #{tpu_custom_call.1} parent=1 // pred_region
      %s20 = ssub.s32 32, 32
      %21 = vsyncadd [#allocation3], %s20
      %s23 = sshll.u32 [#allocation2], 4
      %s24 = int_to_ptr.vmem [resolvable:$true] %s23
      %26 = dma.hbm_to_vmem [thread:$0]  %s0, 32, %s24, [#allocation3]
    $region5: #{tpu_custom_call.1} parent=1 // pred_fallthru
      _
    // Predicated region
    $region6: #{tpu_custom_call.1} parent=1 // pred_check
      _
    $region7: #{tpu_custom_call.1} parent=1 // pred_check_branch
      %28 = sbr.rel (0) target = $region9
    $region8: #{tpu_custom_call.1} parent=1 // pred_region
      %s30 = ssub.s32 32, 32
      %31 = vsyncadd [#allocation5], %s30
      %s33 = sshll.u32 [#allocation4], 4
      %s34 = int_to_ptr.vmem [resolvable:$true] %s33
      %36 = dma.hbm_to_vmem [thread:$0]  %s1, 32, %s34, [#allocation5]
    $region9: #{tpu_custom_call.1} parent=1 // pred_fallthru
      _
    // Predicated region
    $region10: #{tpu_custom_call.1} parent=1 // pred_check
      _
    $region11: #{tpu_custom_call.1} parent=1 // pred_check_branch
      %38 = sbr.rel (0) target = $region13
    $region12: #{tpu_custom_call.1} parent=1 // pred_region
      %s40 = ssub.s32 128, 128
      %41 = vsyncadd [#allocation5], %s40
      %s43 = sshll.u32 [#allocation6], 4
      %s44 = int_to_ptr.vmem [resolvable:$true] %s43
      %46 = dma.hbm_to_vmem [thread:$0]  %s2, 128, %s44, [#allocation5]
    $region13: #{tpu_custom_call.1} parent=1 // pred_fallthru
      _
    // Predicated region
    $region14: #{tpu_custom_call.1} parent=1 // pred_check
      _
    $region15: #{tpu_custom_call.1} parent=1 // pred_check_branch
      %48 = sbr.rel (0) target = $region17
    $region16: #{tpu_custom_call.1} parent=1 // pred_region
      %s50 = ssub.s32 128, 128
      %51 = vsyncadd [#allocation8], %s50
      %s53 = sshll.u32 [#allocation7], 4
      %s54 = int_to_ptr.vmem [resolvable:$true] %s53
      %56 = dma.hbm_to_vmem [thread:$0]  %s3, 128, %s54, [#allocation8]
    $region17: #{tpu_custom_call.1} parent=1 // pred_fallthru
      _
    // Predicated region
    $region18: #{tpu_custom_call.1} parent=1 // pred_check
      _
    $region19: #{tpu_custom_call.1} parent=1 // pred_check_branch
      %58 = sbr.rel (0) target = $region21
    $region20: #{tpu_custom_call.1} parent=1 // pred_region
      %s60 = ssub.s32 2048, 2048
      %61 = vsyncadd [#allocation8], %s60
      %s62 = sshll.u32 [#allocation9], 4
      %s63 = int_to_ptr.vmem [resolvable:$true] %s62
      %68 = dma.hbm_to_vmem [thread:$0]  %s4, 2048, %s63, [#allocation8], 128, 128, 8
    $region21: #{tpu_custom_call.1} parent=1 // pred_fallthru
      _
    // Predicated region
    $region22: #{tpu_custom_call.1} parent=1 // pred_check
      _
    $region23: #{tpu_custom_call.1} parent=1 // pred_check_branch
      %70 = sbr.rel (0) target = $region25
    $region24: #{tpu_custom_call.1} parent=1 // pred_region
      _
    $region25: #{tpu_custom_call.1} parent=1 // pred_fallthru
      _
    // Predicated region
    $region26: #{tpu_custom_call.1} parent=1 // pred_check
      _
    $region27: #{tpu_custom_call.1} parent=1 // pred_check_branch
      %72 = sbr.rel (0) target = $region29
    $region28: #{tpu_custom_call.1} parent=1 // pred_region
      %s74 = ssub.s32 2048, 2048
      %75 = vsyncadd [#allocation11], %s74
      %s76 = sshll.u32 [#allocation10], 4
      %s77 = int_to_ptr.vmem [resolvable:$true] %s76
      %82 = dma.hbm_to_vmem [thread:$0]  %s6, 2048, %s77, [#allocation11], 128, 128, 8
    $region29: #{tpu_custom_call.1} parent=1 // pred_fallthru
      _
    // Predicated region
    $region30: #{tpu_custom_call.1} parent=1 // pred_check
      _
    $region31: #{tpu_custom_call.1} parent=1 // pred_check_branch
      %84 = sbr.rel (0) target = $region33
    $region32: #{tpu_custom_call.1} parent=1 // pred_region
      _
    $region33: #{tpu_custom_call.1} parent=1 // pred_fallthru
      _
    // Predicated region
    $region34: #{tpu_custom_call.1} parent=1 // pred_check
      _
    $region35: #{tpu_custom_call.1} parent=1 // pred_check_branch
      %86 = sbr.rel (0) target = $region37
    $region36: #{tpu_custom_call.1} parent=1 // pred_region
      %87 = dma.done [#allocation3], 32
    $region37: #{tpu_custom_call.1} parent=1 // pred_fallthru
      _
    // Predicated region
    $region38: #{tpu_custom_call.1} parent=1 // pred_check
      _
    $region39: #{tpu_custom_call.1} parent=1 // pred_check_branch
      %89 = sbr.rel (0) target = $region41
    $region40: #{tpu_custom_call.1} parent=1 // pred_region
      %90 = dma.done [#allocation5], 32
    $region41: #{tpu_custom_call.1} parent=1 // pred_fallthru
      _
    // Predicated region
    $region42: #{tpu_custom_call.1} parent=1 // pred_check
      _
    $region43: #{tpu_custom_call.1} parent=1 // pred_check_branch
      %92 = sbr.rel (0) target = $region45
    $region44: #{tpu_custom_call.1} parent=1 // pred_region
      %93 = dma.done [#allocation5], 128
    $region45: #{tpu_custom_call.1} parent=1 // pred_fallthru
      _
    // Predicated region
    $region46: #{tpu_custom_call.1} parent=1 // pred_check
      _
    $region47: #{tpu_custom_call.1} parent=1 // pred_check_branch
      %95 = sbr.rel (0) target = $region49
    $region48: #{tpu_custom_call.1} parent=1 // pred_region
      %96 = dma.done [#allocation8], 128
    $region49: #{tpu_custom_call.1} parent=1 // pred_fallthru
      _
    // Predicated region
    $region50: #{tpu_custom_call.1} parent=1 // pred_check
      _
    $region51: #{tpu_custom_call.1} parent=1 // pred_check_branch
      %98 = sbr.rel (0) target = $region53
    $region52: #{tpu_custom_call.1} parent=1 // pred_region
      %99 = dma.done [#allocation8], 2048
    $region53: #{tpu_custom_call.1} parent=1 // pred_fallthru
      _
    // Predicated region
    $region54: #{tpu_custom_call.1} parent=1 // pred_check
      _
    $region55: #{tpu_custom_call.1} parent=1 // pred_check_branch
      %101 = sbr.rel (0) target = $region57
    $region56: #{tpu_custom_call.1} parent=1 // pred_region
      %102 = dma.done [#allocation11], 2048
    $region57: #{tpu_custom_call.1} parent=1 // pred_fallthru
      _
    %v103 = vld [vmem:[#allocation9] sm:$0xff]
    %v104 = vld [vmem:[#allocation9 + $0x8] sm:$0xff]
    %v105 = vld [vmem:[#allocation9 + $0x10] sm:$0xff]
    %v106 = vld [vmem:[#allocation9 + $0x18] sm:$0xff]
    %v107 = vld [vmem:[#allocation9 + $0x20] sm:$0xff]
    %v108 = vld [vmem:[#allocation9 + $0x28] sm:$0xff]
    %v109 = vld [vmem:[#allocation9 + $0x30] sm:$0xff]
    %v110 = vld [vmem:[#allocation9 + $0x38] sm:$0xff]
    %v111 = vld [vmem:[#allocation9 + $0x40] sm:$0xff]
    %v112 = vld [vmem:[#allocation9 + $0x48] sm:$0xff]
    %v113 = vld [vmem:[#allocation9 + $0x50] sm:$0xff]
    %v114 = vld [vmem:[#allocation9 + $0x58] sm:$0xff]
    %v115 = vld [vmem:[#allocation9 + $0x60] sm:$0xff]
    %v116 = vld [vmem:[#allocation9 + $0x68] sm:$0xff]
    %v117 = vld [vmem:[#allocation9 + $0x70] sm:$0xff]
    %v118 = vld [vmem:[#allocation9 + $0x78] sm:$0xff]
    %v119 = vld [vmem:[#allocation10] sm:$0xff]
    %v120 = vld [vmem:[#allocation10 + $0x8] sm:$0xff]
    %v121 = vld [vmem:[#allocation10 + $0x10] sm:$0xff]
    %v122 = vld [vmem:[#allocation10 + $0x18] sm:$0xff]
    %v123 = vld [vmem:[#allocation10 + $0x20] sm:$0xff]
    %v124 = vld [vmem:[#allocation10 + $0x28] sm:$0xff]
    %v125 = vld [vmem:[#allocation10 + $0x30] sm:$0xff]
    %v126 = vld [vmem:[#allocation10 + $0x38] sm:$0xff]
    %v127 = vld [vmem:[#allocation10 + $0x40] sm:$0xff]
    %v128 = vld [vmem:[#allocation10 + $0x48] sm:$0xff]
    %v129 = vld [vmem:[#allocation10 + $0x50] sm:$0xff]
    %v130 = vld [vmem:[#allocation10 + $0x58] sm:$0xff]
    %v131 = vld [vmem:[#allocation10 + $0x60] sm:$0xff]
    %v132 = vld [vmem:[#allocation10 + $0x68] sm:$0xff]
    %v133 = vld [vmem:[#allocation10 + $0x70] sm:$0xff]
    %v134 = vld [vmem:[#allocation10 + $0x78] sm:$0xff]
    %v135 = vld [vmem:[%s5] sm:$0x1]
    %v136 = vld [vmem:[%s7] sm:$0x1]
    %v137 = vld [vmem:[#allocation2] sm:$0x3]
    %v139 = vlaneseq
    %v140 = vshrl.u32 %v139, 7
    %v141 = vsub.s32 0, %v140
    %v142 = vrot.slane %v135, %v141
    %144 = vmatprep.subr.mxu0 0.0
    %145 = vmatpush1.msra.mxu0 %v118
    %146 = vmatprep.subr.mxu0 0.0
    %147 = vmatpush1.msra.mxu0 %v117
    %148 = vmatprep.subr.mxu0 0.0
    %149 = vmatpush1.msra.mxu0 %v116
    %150 = vmatprep.subr.mxu0 0.0
    %151 = vmatpush1.msra.mxu0 %v115
    %152 = vmatprep.subr.mxu0 0.0
    %153 = vmatpush1.msra.mxu0 %v114
    %154 = vmatprep.subr.mxu0 0.0
    %155 = vmatpush1.msra.mxu0 %v113
    %156 = vmatprep.subr.mxu0 0.0
    %157 = vmatpush1.msra.mxu0 %v112
    %158 = vmatprep.subr.mxu0 0.0
    %159 = vmatpush1.msra.mxu0 %v111
    %160 = vmatprep.subr.mxu0 0.0
    %161 = vmatpush1.msra.mxu0 %v110
    %162 = vmatprep.subr.mxu0 0.0
    %163 = vmatpush1.msra.mxu0 %v109
    %164 = vmatprep.subr.mxu0 0.0
    %165 = vmatpush1.msra.mxu0 %v108
    %166 = vmatprep.subr.mxu0 0.0
    %167 = vmatpush1.msra.mxu0 %v107
    %168 = vmatprep.subr.mxu0 0.0
    %169 = vmatpush1.msra.mxu0 %v106
    %170 = vmatprep.subr.mxu0 0.0
    %171 = vmatpush1.msra.mxu0 %v105
    %172 = vmatprep.subr.mxu0 0.0
    %173 = vmatpush1.msra.mxu0 %v104
    %174 = vmatprep.subr.mxu0 0.0
    %175 = vmatpush1.msra.mxu0 %v103
    %176 = vmatprep.subr.mxu0 0.0
    %177 = vmatpush2.msra.mxu0 0.0
    %178 = vmatprep.subr.mxu0 0.0
    %179 = vmatpush2.msra.mxu0 0.0
    %180 = vmatprep.subr.mxu0 0.0
    %181 = vmatpush2.msra.mxu0 0.0
    %182 = vmatprep.subr.mxu0 0.0
    %183 = vmatpush2.msra.mxu0 0.0
    %184 = vmatprep.subr.mxu0 0.0
    %185 = vmatpush2.msra.mxu0 0.0
    %186 = vmatprep.subr.mxu0 0.0
    %187 = vmatpush2.msra.mxu0 0.0
    %188 = vmatprep.subr.mxu0 0.0
    %189 = vmatpush2.msra.mxu0 0.0
    %190 = vmatprep.subr.mxu0 0.0
    %191 = vmatpush2.msra.mxu0 0.0
    %192 = vmatprep.subr.mxu0 0.0
    %193 = vmatpush2.msra.mxu0 0.0
    %194 = vmatprep.subr.mxu0 0.0
    %195 = vmatpush2.msra.mxu0 0.0
    %196 = vmatprep.subr.mxu0 0.0
    %197 = vmatpush2.msra.mxu0 0.0
    %198 = vmatprep.subr.mxu0 0.0
    %199 = vmatpush2.msra.mxu0 0.0
    %200 = vmatprep.subr.mxu0 0.0
    %201 = vmatpush2.msra.mxu0 0.0
    %202 = vmatprep.subr.mxu0 0.0
    %203 = vmatpush2.msra.mxu0 0.0
    %204 = vmatprep.subr.mxu0 0.0
    %205 = vmatpush2.msra.mxu0 0.0
    %206 = vmatprep.subr.mxu0 0.0
    %207 = vmatpush2.msra.mxu0 0.0
    %208 = vmatprep.mubr.f32.mxu0 0.0
    %209 = vmatmul.mubr.f32.gmra.mxu0 %v137
    %v210 = vpop.f32.mrf.mxu0
    %v211 = vadd.f32 %v142, %v210
    %v212 = vpop.f32.mrf.mxu0
    %213 = vdwg.mxu0
    %v214 = vmul.f32 %v211, %v211
    %vm215 = vcmask 1041408
    %v216 = vsel %vm215, %v214, 0.0
    %217 = vadd.xlane.f32.xlu0 %v216
    %v218 = vpop.xlane.xlu0 %217
    %v219 = vadd.f32 %v218, 1e-30
    %v220 = vrsqrt.pop %v219
    %v221 = vmul.f32 %v211, %v220
    %v222 = vld [vmem:[#allocation4] sm:$0x3]
    %v224 = vlaneseq
    %v225 = vshrl.u32 %v224, 7
    %v226 = vsub.s32 0, %v225
    %v227 = vrot.slane %v136, %v226
    %229 = vmatprep.subr.mxu0 0.0
    %230 = vmatpush1.msra.mxu0 %v134
    %231 = vmatprep.subr.mxu0 0.0
    %232 = vmatpush1.msra.mxu0 %v133
    %233 = vmatprep.subr.mxu0 0.0
    %234 = vmatpush1.msra.mxu0 %v132
    %235 = vmatprep.subr.mxu0 0.0
    %236 = vmatpush1.msra.mxu0 %v131
    %237 = vmatprep.subr.mxu0 0.0
    %238 = vmatpush1.msra.mxu0 %v130
    %239 = vmatprep.subr.mxu0 0.0
    %240 = vmatpush1.msra.mxu0 %v129
    %241 = vmatprep.subr.mxu0 0.0
    %242 = vmatpush1.msra.mxu0 %v128
    %243 = vmatprep.subr.mxu0 0.0
    %244 = vmatpush1.msra.mxu0 %v127
    %245 = vmatprep.subr.mxu0 0.0
    %246 = vmatpush1.msra.mxu0 %v126
    %247 = vmatprep.subr.mxu0 0.0
    %248 = vmatpush1.msra.mxu0 %v125
    %249 = vmatprep.subr.mxu0 0.0
    %250 = vmatpush1.msra.mxu0 %v124
    %251 = vmatprep.subr.mxu0 0.0
    %252 = vmatpush1.msra.mxu0 %v123
    %253 = vmatprep.subr.mxu0 0.0
    %254 = vmatpush1.msra.mxu0 %v122
    %255 = vmatprep.subr.mxu0 0.0
    %256 = vmatpush1.msra.mxu0 %v121
    %257 = vmatprep.subr.mxu0 0.0
    %258 = vmatpush1.msra.mxu0 %v120
    %259 = vmatprep.subr.mxu0 0.0
    %260 = vmatpush1.msra.mxu0 %v119
    %261 = vmatprep.subr.mxu0 0.0
    %262 = vmatpush2.msra.mxu0 0.0
    %263 = vmatprep.subr.mxu0 0.0
    %264 = vmatpush2.msra.mxu0 0.0
    %265 = vmatprep.subr.mxu0 0.0
    %266 = vmatpush2.msra.mxu0 0.0
    %267 = vmatprep.subr.mxu0 0.0
    %268 = vmatpush2.msra.mxu0 0.0
    %269 = vmatprep.subr.mxu0 0.0
    %270 = vmatpush2.msra.mxu0 0.0
    %271 = vmatprep.subr.mxu0 0.0
    %272 = vmatpush2.msra.mxu0 0.0
    %273 = vmatprep.subr.mxu0 0.0
    %274 = vmatpush2.msra.mxu0 0.0
    %275 = vmatprep.subr.mxu0 0.0
    %276 = vmatpush2.msra.mxu0 0.0
    %277 = vmatprep.subr.mxu0 0.0
    %278 = vmatpush2.msra.mxu0 0.0
    %279 = vmatprep.subr.mxu0 0.0
    %280 = vmatpush2.msra.mxu0 0.0
    %281 = vmatprep.subr.mxu0 0.0
    %282 = vmatpush2.msra.mxu0 0.0
    %283 = vmatprep.subr.mxu0 0.0
    %284 = vmatpush2.msra.mxu0 0.0
    %285 = vmatprep.subr.mxu0 0.0
    %286 = vmatpush2.msra.mxu0 0.0
    %287 = vmatprep.subr.mxu0 0.0
    %288 = vmatpush2.msra.mxu0 0.0
    %289 = vmatprep.subr.mxu0 0.0
    %290 = vmatpush2.msra.mxu0 0.0
    %291 = vmatprep.subr.mxu0 0.0
    %292 = vmatpush2.msra.mxu0 0.0
    %293 = vmatprep.mubr.f32.mxu0 0.0
    %294 = vmatmul.mubr.f32.gmra.mxu0 %v222
    %v295 = vpop.f32.mrf.mxu0
    %v296 = vadd.f32 %v227, %v295
    %v297 = vpop.f32.mrf.mxu0
    %298 = vdwg.mxu0
    %v299 = vmul.f32 %v296, %v296
    %v300 = vsel %vm215, %v299, 0.0
    %301 = vadd.xlane.f32.xlu0 %v300
    %v302 = vpop.xlane.xlu0 %301
    %v303 = vadd.f32 %v302, 1e-30
    %v304 = vrsqrt.pop %v303
    %v305 = vmul.f32 %v296, %v304
    %v306 = vld [vmem:[#allocation6] sm:$0xff]
    %307 = vmatprep.subr.mxu0 0.0
    %308 = vmatpush1.msra.mxu0 %v118
    %309 = vmatprep.subr.mxu0 0.0
    %310 = vmatpush1.msra.mxu0 %v117
    %311 = vmatprep.subr.mxu0 0.0
    %312 = vmatpush1.msra.mxu0 %v116
    %313 = vmatprep.subr.mxu0 0.0
    %314 = vmatpush1.msra.mxu0 %v115
    %315 = vmatprep.subr.mxu0 0.0
    %316 = vmatpush1.msra.mxu0 %v114
    %317 = vmatprep.subr.mxu0 0.0
    %318 = vmatpush1.msra.mxu0 %v113
    %319 = vmatprep.subr.mxu0 0.0
    %320 = vmatpush1.msra.mxu0 %v112
    %321 = vmatprep.subr.mxu0 0.0
    %322 = vmatpush1.msra.mxu0 %v111
    %323 = vmatprep.subr.mxu0 0.0
    %324 = vmatpush1.msra.mxu0 %v110
    %325 = vmatprep.subr.mxu0 0.0
    %326 = vmatpush1.msra.mxu0 %v109
    %327 = vmatprep.subr.mxu0 0.0
    %328 = vmatpush1.msra.mxu0 %v108
    %329 = vmatprep.subr.mxu0 0.0
    %330 = vmatpush1.msra.mxu0 %v107
    %331 = vmatprep.subr.mxu0 0.0
    %332 = vmatpush1.msra.mxu0 %v106
    %333 = vmatprep.subr.mxu0 0.0
    %334 = vmatpush1.msra.mxu0 %v105
    %335 = vmatprep.subr.mxu0 0.0
    %336 = vmatpush1.msra.mxu0 %v104
    %337 = vmatprep.subr.mxu0 0.0
    %338 = vmatpush1.msra.mxu0 %v103
    %339 = vmatprep.subr.mxu0 0.0
    %340 = vmatpush2.msra.mxu0 0.0
    %341 = vmatprep.subr.mxu0 0.0
    %342 = vmatpush2.msra.mxu0 0.0
    %343 = vmatprep.subr.mxu0 0.0
    %344 = vmatpush2.msra.mxu0 0.0
    %345 = vmatprep.subr.mxu0 0.0
    %346 = vmatpush2.msra.mxu0 0.0
    %347 = vmatprep.subr.mxu0 0.0
    %348 = vmatpush2.msra.mxu0 0.0
    %349 = vmatprep.subr.mxu0 0.0
    %350 = vmatpush2.msra.mxu0 0.0
    %351 = vmatprep.subr.mxu0 0.0
    %352 = vmatpush2.msra.mxu0 0.0
    %353 = vmatprep.subr.mxu0 0.0
    %354 = vmatpush2.msra.mxu0 0.0
    %355 = vmatprep.subr.mxu0 0.0
    %356 = vmatpush2.msra.mxu0 0.0
    %357 = vmatprep.subr.mxu0 0.0
    %358 = vmatpush2.msra.mxu0 0.0
    %359 = vmatprep.subr.mxu0 0.0
    %360 = vmatpush2.msra.mxu0 0.0
    %361 = vmatprep.subr.mxu0 0.0
    %362 = vmatpush2.msra.mxu0 0.0
    %363 = vmatprep.subr.mxu0 0.0
    %364 = vmatpush2.msra.mxu0 0.0
    %365 = vmatprep.subr.mxu0 0.0
    %366 = vmatpush2.msra.mxu0 0.0
    %367 = vmatprep.subr.mxu0 0.0
    %368 = vmatpush2.msra.mxu0 0.0
    %369 = vmatprep.subr.mxu0 0.0
    %370 = vmatpush2.msra.mxu0 0.0
    %371 = vmatprep.mubr.f32.mxu0 0.0
    %372 = vmatmul.mubr.f32.gmra.mxu0 %v306
    %v373 = vpop.f32.mrf.mxu0
    %v374 = vadd.f32 %v142, %v373
    %v375 = vpop.f32.mrf.mxu0
    %376 = vdwg.mxu0
    %v377 = vmul.f32 %v374, %v374
    %378 = vadd.xlane.f32.xlu0 %v377
    %v379 = vpop.xlane.xlu0 %378
    %v380 = vadd.f32 %v379, 1e-30
    %v381 = vrsqrt.pop %v380
    %v382 = vmul.f32 %v374, %v381
    %v383 = vld [vmem:[#allocation7] sm:$0xff]
    %384 = vmatprep.subr.mxu0 0.0
    %385 = vmatpush1.msra.mxu0 %v134
    %386 = vmatprep.subr.mxu0 0.0
    %387 = vmatpush1.msra.mxu0 %v133
    %388 = vmatprep.subr.mxu0 0.0
    %389 = vmatpush1.msra.mxu0 %v132
    %390 = vmatprep.subr.mxu0 0.0
    %391 = vmatpush1.msra.mxu0 %v131
    %392 = vmatprep.subr.mxu0 0.0
    %393 = vmatpush1.msra.mxu0 %v130
    %394 = vmatprep.subr.mxu0 0.0
    %395 = vmatpush1.msra.mxu0 %v129
    %396 = vmatprep.subr.mxu0 0.0
    %397 = vmatpush1.msra.mxu0 %v128
    %398 = vmatprep.subr.mxu0 0.0
    %399 = vmatpush1.msra.mxu0 %v127
    %400 = vmatprep.subr.mxu0 0.0
    %401 = vmatpush1.msra.mxu0 %v126
    %402 = vmatprep.subr.mxu0 0.0
    %403 = vmatpush1.msra.mxu0 %v125
    %404 = vmatprep.subr.mxu0 0.0
    %405 = vmatpush1.msra.mxu0 %v124
    %406 = vmatprep.subr.mxu0 0.0
    %407 = vmatpush1.msra.mxu0 %v123
    %408 = vmatprep.subr.mxu0 0.0
    %409 = vmatpush1.msra.mxu0 %v122
    %410 = vmatprep.subr.mxu0 0.0
    %411 = vmatpush1.msra.mxu0 %v121
    %412 = vmatprep.subr.mxu0 0.0
    %413 = vmatpush1.msra.mxu0 %v120
    %414 = vmatprep.subr.mxu0 0.0
    %415 = vmatpush1.msra.mxu0 %v119
    %416 = vmatprep.subr.mxu0 0.0
    %417 = vmatpush2.msra.mxu0 0.0
    %418 = vmatprep.subr.mxu0 0.0
    %419 = vmatpush2.msra.mxu0 0.0
    %420 = vmatprep.subr.mxu0 0.0
    %421 = vmatpush2.msra.mxu0 0.0
    %422 = vmatprep.subr.mxu0 0.0
    %423 = vmatpush2.msra.mxu0 0.0
    %424 = vmatprep.subr.mxu0 0.0
    %425 = vmatpush2.msra.mxu0 0.0
    %426 = vmatprep.subr.mxu0 0.0
    %427 = vmatpush2.msra.mxu0 0.0
    %428 = vmatprep.subr.mxu0 0.0
    %429 = vmatpush2.msra.mxu0 0.0
    %430 = vmatprep.subr.mxu0 0.0
    %431 = vmatpush2.msra.mxu0 0.0
    %432 = vmatprep.subr.mxu0 0.0
    %433 = vmatpush2.msra.mxu0 0.0
    %434 = vmatprep.subr.mxu0 0.0
    %435 = vmatpush2.msra.mxu0 0.0
    %436 = vmatprep.subr.mxu0 0.0
    %437 = vmatpush2.msra.mxu0 0.0
    %438 = vmatprep.subr.mxu0 0.0
    %439 = vmatpush2.msra.mxu0 0.0
    %440 = vmatprep.subr.mxu0 0.0
    %441 = vmatpush2.msra.mxu0 0.0
    %442 = vmatprep.subr.mxu0 0.0
    %443 = vmatpush2.msra.mxu0 0.0
    %444 = vmatprep.subr.mxu0 0.0
    %445 = vmatpush2.msra.mxu0 0.0
    %446 = vmatprep.subr.mxu0 0.0
    %447 = vmatpush2.msra.mxu0 0.0
    %448 = vmatprep.mubr.f32.mxu0 0.0
    %449 = vmatmul.mubr.f32.gmra.mxu0 %v383
    %v450 = vpop.f32.mrf.mxu0
    %v451 = vadd.f32 %v227, %v450
    %v452 = vpop.f32.mrf.mxu0
    %453 = vdwg.mxu0
    %v454 = vmul.f32 %v451, %v451
    %455 = vadd.xlane.f32.xlu0 %v454
    %v456 = vpop.xlane.xlu0 %455
    %v457 = vadd.f32 %v456, 1e-30
    %v458 = vrsqrt.pop %v457
    %v459 = vmul.f32 %v451, %v458
    %460 = vmatprep.subr.mxu0 0.0
    %461 = vmatpush1.xpose.msra.mxu0 0.0
    %462 = vmatprep.subr.mxu0 0.0
    %463 = vmatpush1.xpose.msra.mxu0 0.0
    %464 = vmatprep.subr.mxu0 0.0
    %465 = vmatpush1.xpose.msra.mxu0 0.0
    %466 = vmatprep.subr.mxu0 0.0
    %467 = vmatpush1.xpose.msra.mxu0 0.0
    %468 = vmatprep.subr.mxu0 0.0
    %469 = vmatpush1.xpose.msra.mxu0 0.0
    %470 = vmatprep.subr.mxu0 0.0
    %471 = vmatpush1.xpose.msra.mxu0 0.0
    %472 = vmatprep.subr.mxu0 0.0
    %473 = vmatpush1.xpose.msra.mxu0 0.0
    %474 = vmatprep.subr.mxu0 0.0
    %475 = vmatpush1.xpose.msra.mxu0 0.0
    %476 = vmatprep.subr.mxu0 0.0
    %477 = vmatpush1.xpose.msra.mxu0 0.0
    %478 = vmatprep.subr.mxu0 0.0
    %479 = vmatpush1.xpose.msra.mxu0 0.0
    %480 = vmatprep.subr.mxu0 0.0
    %481 = vmatpush1.xpose.msra.mxu0 0.0
    %482 = vmatprep.subr.mxu0 0.0
    %483 = vmatpush1.xpose.msra.mxu0 0.0
    %484 = vmatprep.subr.mxu0 0.0
    %485 = vmatpush1.xpose.msra.mxu0 0.0
    %486 = vmatprep.subr.mxu0 0.0
    %487 = vmatpush1.xpose.msra.mxu0 0.0
    %488 = vmatprep.subr.mxu0 0.0
    %489 = vmatpush1.xpose.msra.mxu0 0.0
    %490 = vmatprep.subr.mxu0 0.0
    %491 = vmatpush1.xpose.msra.mxu0 %v459
    %492 = vmatprep.subr.mxu0 0.0
    %493 = vmatpush2.xpose.msra.mxu0 0.0
    %494 = vmatprep.subr.mxu0 0.0
    %495 = vmatpush2.xpose.msra.mxu0 0.0
    %496 = vmatprep.subr.mxu0 0.0
    %497 = vmatpush2.xpose.msra.mxu0 0.0
    %498 = vmatprep.subr.mxu0 0.0
    %499 = vmatpush2.xpose.msra.mxu0 0.0
    %500 = vmatprep.subr.mxu0 0.0
    %501 = vmatpush2.xpose.msra.mxu0 0.0
    %502 = vmatprep.subr.mxu0 0.0
    %503 = vmatpush2.xpose.msra.mxu0 0.0
    %504 = vmatprep.subr.mxu0 0.0
    %505 = vmatpush2.xpose.msra.mxu0 0.0
    %506 = vmatprep.subr.mxu0 0.0
    %507 = vmatpush2.xpose.msra.mxu0 0.0
    %508 = vmatprep.subr.mxu0 0.0
    %509 = vmatpush2.xpose.msra.mxu0 0.0
    %510 = vmatprep.subr.mxu0 0.0
    %511 = vmatpush2.xpose.msra.mxu0 0.0
    %512 = vmatprep.subr.mxu0 0.0
    %513 = vmatpush2.xpose.msra.mxu0 0.0
    %514 = vmatprep.subr.mxu0 0.0
    %515 = vmatpush2.xpose.msra.mxu0 0.0
    %516 = vmatprep.subr.mxu0 0.0
    %517 = vmatpush2.xpose.msra.mxu0 0.0
    %518 = vmatprep.subr.mxu0 0.0
    %519 = vmatpush2.xpose.msra.mxu0 0.0
    %520 = vmatprep.subr.mxu0 0.0
    %521 = vmatpush2.xpose.msra.mxu0 0.0
    %522 = vmatprep.subr.mxu0 0.0
    %523 = vmatpush2.xpose.msra.mxu0 0.0
    %524 = vmatprep.mubr.f32.mxu0 0.0
    %525 = vmatmul.mubr.f32.gmra.mxu0 %v221
    %v526 = vpop.f32.mrf.mxu0
    %v527 = vadd.f32 0.0, %v526
    %v528 = vpop.f32.mrf.mxu0
    %529 = vdwg.mxu0
    %530 = vmatprep.subr.mxu0 0.0
    %531 = vmatpush1.xpose.msra.mxu0 0.0
    %532 = vmatprep.subr.mxu0 0.0
    %533 = vmatpush1.xpose.msra.mxu0 0.0
    %534 = vmatprep.subr.mxu0 0.0
    %535 = vmatpush1.xpose.msra.mxu0 0.0
    %536 = vmatprep.subr.mxu0 0.0
    %537 = vmatpush1.xpose.msra.mxu0 0.0
    %538 = vmatprep.subr.mxu0 0.0
    %539 = vmatpush1.xpose.msra.mxu0 0.0
    %540 = vmatprep.subr.mxu0 0.0
    %541 = vmatpush1.xpose.msra.mxu0 0.0
    %542 = vmatprep.subr.mxu0 0.0
    %543 = vmatpush1.xpose.msra.mxu0 0.0
    %544 = vmatprep.subr.mxu0 0.0
    %545 = vmatpush1.xpose.msra.mxu0 0.0
    %546 = vmatprep.subr.mxu0 0.0
    %547 = vmatpush1.xpose.msra.mxu0 0.0
    %548 = vmatprep.subr.mxu0 0.0
    %549 = vmatpush1.xpose.msra.mxu0 0.0
    %550 = vmatprep.subr.mxu0 0.0
    %551 = vmatpush1.xpose.msra.mxu0 0.0
    %552 = vmatprep.subr.mxu0 0.0
    %553 = vmatpush1.xpose.msra.mxu0 0.0
    %554 = vmatprep.subr.mxu0 0.0
    %555 = vmatpush1.xpose.msra.mxu0 0.0
    %556 = vmatprep.subr.mxu0 0.0
    %557 = vmatpush1.xpose.msra.mxu0 0.0
    %558 = vmatprep.subr.mxu0 0.0
    %559 = vmatpush1.xpose.msra.mxu0 0.0
    %560 = vmatprep.subr.mxu0 0.0
    %561 = vmatpush1.xpose.msra.mxu0 %v382
    %562 = vmatprep.subr.mxu0 0.0
    %563 = vmatpush2.xpose.msra.mxu0 0.0
    %564 = vmatprep.subr.mxu0 0.0
    %565 = vmatpush2.xpose.msra.mxu0 0.0
    %566 = vmatprep.subr.mxu0 0.0
    %567 = vmatpush2.xpose.msra.mxu0 0.0
    %568 = vmatprep.subr.mxu0 0.0
    %569 = vmatpush2.xpose.msra.mxu0 0.0
    %570 = vmatprep.subr.mxu0 0.0
    %571 = vmatpush2.xpose.msra.mxu0 0.0
    %572 = vmatprep.subr.mxu0 0.0
    %573 = vmatpush2.xpose.msra.mxu0 0.0
    %574 = vmatprep.subr.mxu0 0.0
    %575 = vmatpush2.xpose.msra.mxu0 0.0
    %576 = vmatprep.subr.mxu0 0.0
    %577 = vmatpush2.xpose.msra.mxu0 0.0
    %578 = vmatprep.subr.mxu0 0.0
    %579 = vmatpush2.xpose.msra.mxu0 0.0
    %580 = vmatprep.subr.mxu0 0.0
    %581 = vmatpush2.xpose.msra.mxu0 0.0
    %582 = vmatprep.subr.mxu0 0.0
    %583 = vmatpush2.xpose.msra.mxu0 0.0
    %584 = vmatprep.subr.mxu0 0.0
    %585 = vmatpush2.xpose.msra.mxu0 0.0
    %586 = vmatprep.subr.mxu0 0.0
    %587 = vmatpush2.xpose.msra.mxu0 0.0
    %588 = vmatprep.subr.mxu0 0.0
    %589 = vmatpush2.xpose.msra.mxu0 0.0
    %590 = vmatprep.subr.mxu0 0.0
    %591 = vmatpush2.xpose.msra.mxu0 0.0
    %592 = vmatprep.subr.mxu0 0.0
    %593 = vmatpush2.xpose.msra.mxu0 0.0
    %594 = vmatprep.mubr.f32.mxu0 0.0
    %595 = vmatmul.mubr.f32.gmra.mxu0 %v305
    %v596 = vpop.f32.mrf.mxu0
    %v597 = vadd.f32 0.0, %v596
    %v598 = vpop.f32.mrf.mxu0
    %599 = vdwg.mxu0
    %v600 = vmul.f32 %v221, %v305
    %v601 = vsel %vm215, %v600, 0.0
    %602 = vadd.xlane.f32.xlu0 %v601
    %v603 = vpop.xlane.xlu0 %602
    %v604 = vlaneseq
    %v605 = vshrl.u32 %v604, 7
    %v606 = vlaneseq
    %v607 = vand.u32 %v606, 127
    %v608 = vmul.u32 %v605, 4
    %vm609 = vcmp.ge.s32.totalorder %v607, %v608
    %v610 = vadd.s32 %v605, 1
    %v611 = vmul.u32 %v610, 4
    %vm612 = vcmp.lt.s32.totalorder %v607, %v611
    %vm613 = vmand %vm609, %vm612
    %v614 = vsel %vm613, 1, 0
    %v615 = vcvt.s32.f32 %v614
    %v616 = vmul.f32 %v615, %v603
    %vm617 = vcmask 58368
    %v618 = vsel %vm617, %v616, 0.0
    %v619 = vrot.slane %v618, 4
    %v620 = vadd.f32 %v618, %v619
    %v621 = vrot.slane %v620, 2
    %v622 = vadd.f32 %v620, %v621
    %v623 = vrot.slane %v622, 1
    %v624 = vadd.f32 %v622, %v623
    %vm625 = vcmask 57344
    %626 = vst.msk [vmem:[%s8] sm:$0x1] %vm625, %v624
    %v627 = vmul.f32 %v615, %v527
    %v628 = vsel %vm617, %v627, 0.0
    %v629 = vrot.slane %v628, 4
    %v630 = vadd.f32 %v628, %v629
    %v631 = vrot.slane %v630, 2
    %v632 = vadd.f32 %v630, %v631
    %v633 = vrot.slane %v632, 1
    %v634 = vadd.f32 %v632, %v633
    %635 = vst.msk [vmem:[%s8 + $0x1] sm:$0x1] %vm625, %v634
    %v636 = vmul.f32 %v615, %v597
    %v637 = vsel %vm617, %v636, 0.0
    %v638 = vrot.slane %v637, 4
    %v639 = vadd.f32 %v637, %v638
    %v640 = vrot.slane %v639, 2
    %v641 = vadd.f32 %v639, %v640
    %v642 = vrot.slane %v641, 1
    %v643 = vadd.f32 %v641, %v642
    %644 = vst.msk [vmem:[%s8 + $0x2] sm:$0x1] %vm625, %v643
    // Predicated region
    $region58: #{tpu_custom_call.1} parent=1 // pred_check
      _
    $region59: #{tpu_custom_call.1} parent=1 // pred_check_branch
      %646 = sbr.rel (0) target = $region61
    $region60: #{tpu_custom_call.1} parent=1 // pred_region
      _
    $region61: #{tpu_custom_call.1} parent=1 // pred_fallthru
      _
    // Predicated region
    $region62: #{tpu_custom_call.1} parent=1 // pred_check
      _
    $region63: #{tpu_custom_call.1} parent=1 // pred_check_branch
      %648 = sbr.rel (0) target = $region65
    $region64: #{tpu_custom_call.1} parent=1 // pred_region
      _
    $region65: #{tpu_custom_call.1} parent=1 // pred_fallthru
      _
    %649 = vsyncpa [#allocation3], 1
    %650 = vsyncpa [#allocation5], 1
    %651 = vsyncpa [#allocation8], 1
    %652 = vsyncpa [#allocation11], 1

</llo_original>
